<compile_context>
chip_gen: v7x
topology: tpu7x:2x2x1
jax: 0.10.0
libtpu: 0.0.40
codegen_flags: <defaults>
</compile_context>

<pallas_src>
import math

import jax
import jax.numpy as jnp
from jax.experimental import pallas as pl
from jax.experimental.pallas import tpu as pltpu

NUM_HEADS = 16
LN_EPS = 1e-5


# ----------------------------------------------------------------------------- kernel
def _cross_encoder_head_kernel(x_ref, mask_ref, selk_ref, selv_ref,
                               wqkv_ref, bqkv_ref, wo_ref, bo_ref,
                               gamma_ref, beta_ref, wc_ref, bc_ref,
                               o_ref,
                               q_s, kT_s, v_s, e_s, attn_s):
    H = NUM_HEADS
    HS = selv_ref.shape[0]            # H * S
    S = HS // H
    R, D = x_ref.shape                # R = block_b * S  (rows in this grid step)
    Bt = R // S                       # batch rows in this grid step

    # ---- fused QKV projection (1/sqrt(Dh) already folded into Q weight & bias) ----
    x_all = x_ref[...]                                                    # (R, D)  f32
    qkv = jnp.dot(x_all.astype(jnp.bfloat16), wqkv_ref[...],
                  preferred_element_type=jnp.float32) + bqkv_ref[...]     # (R, 3D) f32

    q_s[...] = qkv[:, 0:D].astype(jnp.bfloat16)                           # (R, D)  bf16
    v_s[...] = qkv[:, 2 * D:3 * D].astype(jnp.bfloat16)                   # (R, D)  bf16

    # hoisted single K transpose for the whole block, then static per-row stores
    kT_all = qkv[:, D:2 * D].T.astype(jnp.bfloat16)                       # (D, R)  bf16
    for r in range(Bt):                                                   # static slices only
        kT_s[r, :, :] = kT_all[:, r * S:(r + 1) * S]

    # ---- per-batch-row attention: all 16 heads packed along 128 lanes ----
    def row_body(r, carry):
        row0 = pl.multiple_of(r * S, S)
        q = q_s[pl.ds(row0, S), :]                                        # (S, D)  bf16
        v = v_s[pl.ds(row0, S), :]                                        # (S, D)  bf16
        kT = kT_s[r]                                                      # (D, S)  bf16
        selk = selk_ref[...]                                              # (D, HS) bf16 0/1
        selv = selv_ref[...]                                              # (HS, D) bf16 0/1

        # block-diagonal packed K / V (bf16 tile + 0/1 mask; exact)
        k_bd = jnp.concatenate([kT] * H, axis=1) * selk                   # (D, HS)
        v_bd = jnp.concatenate([v] * H, axis=0) * selv                    # (HS, D)

        scores = jnp.dot(q, k_bd, preferred_element_type=jnp.float32)     # (S, HS) f32
        scores = scores + mask_ref[pl.ds(row0, S), :]

        # softmax shift by the global row max (identical math; per-head denominators
        # are recovered from the packed exp with one matmul after the loop)
        m = jnp.max(scores, axis=-1, keepdims=True)
        e = jnp.exp(scores - m)                                           # (S, HS) f32
        e_bf = e.astype(jnp.bfloat16)

        e_s[pl.ds(row0, S), :] = e_bf
        attn_s[pl.ds(row0, S), :] = jnp.dot(e_bf, v_bd,
                                            preferred_element_type=jnp.float32)
        return carry

    jax.lax.fori_loop(0, Bt, row_body, 0, unroll=True)

    # ---- per-head softmax denominators for ALL rows with a single matmul ----
    denom = jnp.dot(e_s[...], selv_ref[...], preferred_element_type=jnp.float32)  # (R, D)
    denom = jnp.maximum(denom, 1e-30)                   # guard fully-masked segments
    attn = attn_s[...] * pl.reciprocal(denom, approx=True)                         # (R, D)

    # ---- fused output projection + residual + LayerNorm (all rows at once) ----
    out = jnp.dot(attn.astype(jnp.bfloat16), wo_ref[...],
                  preferred_element_type=jnp.float32) + bo_ref[...]       # (R, D)
    y = out + x_ref[...]
    mu = jnp.mean(y, axis=-1, keepdims=True)
    var = jnp.mean(jnp.square(y - mu), axis=-1, keepdims=True)
    yn = (y - mu) * jax.lax.rsqrt(var + LN_EPS) * gamma_ref[...] + beta_ref[...]

    # ---- max / mean pooling over the sequence axis + Linear(2D -> 1) ----
    y3 = yn.reshape(Bt, S, D)
    maxp = jnp.max(y3, axis=1)                                            # (Bt, D)
    meanp = jnp.mean(y3, axis=1)                                          # (Bt, D)
    logits = (jnp.sum(maxp * wc_ref[0:1, :], axis=-1, keepdims=True)
              + jnp.sum(meanp * wc_ref[1:2, :], axis=-1, keepdims=True)
              + bc_ref[...])                                              # (Bt, 1)

    # write each batch row's logit broadcast across its S output rows
    # (keeps the output block (block_b*S, 1): sublane-aligned for any block_b)
    for r in range(Bt):
        o_ref[r * S:(r + 1) * S, :] = jnp.broadcast_to(logits[r:r + 1, :], (S, 1))


# ----------------------------------------------------------------------------- wrapper
def t5_cross_encoder_head(x, mask_rows, kparams, block_b=None):
    """x: (B, S, D) f32 "last_hidden_state"; mask_rows: (B*S, H*S) row-expanded packed mask."""
    B, S, D = x.shape
    H = NUM_HEADS
    HS = H * S
    assert S % 8 == 0 and HS % 128 == 0 and D % H == 0

    if block_b is None:
        # >=2 grid steps whenever B >= 2 (lets "parallel" shard over v7x's two TCs),
        # up to 16 batch rows per step to amortize per-step overhead / fill the MXU.
        cap = max(1, min(16, B // 2)) if B >= 2 else 1
        block_b = next(c for c in range(cap, 0, -1) if B % c == 0)
    assert B % block_b == 0

    (selk, selv, wqkv, bqkv, wo, bo, gamma, beta, wc, bc) = kparams
    x_flat = x.reshape(B * S, D)          # lane-dense rows x features slab (no in-kernel reshape)
    R = block_b * S

    in_specs = [
        pl.BlockSpec((R, D), lambda g: (g, 0)),            # hidden states
        pl.BlockSpec((R, HS), lambda g: (g, 0)),           # row-expanded packed additive mask
        pl.BlockSpec((D, HS), lambda g: (0, 0)),           # head selector for K packing (bf16)
        pl.BlockSpec((HS, D), lambda g: (0, 0)),           # head selector for V packing / denom
        pl.BlockSpec((D, 3 * D), lambda g: (0, 0)),        # fused QKV weight (bf16, Q pre-scaled)
        pl.BlockSpec((1, 3 * D), lambda g: (0, 0)),        # fused QKV bias
        pl.BlockSpec((D, D), lambda g: (0, 0)),            # out-proj weight (bf16)
        pl.BlockSpec((1, D), lambda g: (0, 0)),            # out-proj bias
        pl.BlockSpec((1, D), lambda g: (0, 0)),            # LN gamma
        pl.BlockSpec((1, D), lambda g: (0, 0)),            # LN beta
        pl.BlockSpec((2, D), lambda g: (0, 0)),            # classifier weight [max; mean]
        pl.BlockSpec((1, 1), lambda g: (0, 0)),            # classifier bias
    ]
    out_specs = pl.BlockSpec((R, 1), lambda g: (g, 0))
    scratch_shapes = [
        pltpu.VMEM((R, D), jnp.bfloat16),                  # Q (bf16)
        pltpu.VMEM((block_b, D, S), jnp.bfloat16),         # K^T per batch row (bf16)
        pltpu.VMEM((R, D), jnp.bfloat16),                  # V (bf16)
        pltpu.VMEM((R, HS), jnp.bfloat16),                 # exp(scores - max)
        pltpu.VMEM((R, D), jnp.float32),                   # unnormalized attention
    ]
    # TODO(synk): at real T5 dims (D=512-1024, long S) single-buffer the constant weight
    # blocks (pipeline_mode=pl.Buffered(1)) and set vmem_limit_bytes for v7x's 64 MiB VMEM.

    out_rows = pl.pallas_call(
        _cross_encoder_head_kernel,
        grid=(B // block_b,),
        in_specs=in_specs,
        out_specs=out_specs,
        out_shape=jax.ShapeDtypeStruct((B * S, 1), jnp.float32),
        scratch_shapes=scratch_shapes,
        compiler_params=pltpu.CompilerParams(dimension_semantics=("parallel",)),
    )(x_flat, mask_rows, selk, selv, wqkv, bqkv, wo, bo, gamma, beta, wc, bc)

    # each batch's logit was broadcast across its S rows; take the first
    return out_rows.reshape(B, S)[:, 0:1]


# ----------------------------------------------------------------------------- host glue
def build_multihead_mask(attention_mask):
    """Exactly reproduce the PyTorch repeat(16,1,1) index ordering: head h of batch b
    uses the mask row of batch (b*H + h) % B."""
    B, S = attention_mask.shape
    add = (1.0 - attention_mask.astype(jnp.float32)) * -1e9              # (B, S)
    k = jnp.arange(B * NUM_HEADS)
    return add[k % B].reshape(B, NUM_HEADS, S)                           # (B, H, S)


def build_packed_mask_rows(attention_mask):
    """(B*S, H*S) additive mask; row b*S+i = lane-packed mask for batch b (query-indep.)."""
    B, S = attention_mask.shape
    per_batch = build_multihead_mask(attention_mask).reshape(B, NUM_HEADS * S)   # (B, H*S)
    return jnp.broadcast_to(per_batch[:, None, :],
                            (B, S, NUM_HEADS * S)).reshape(B * S, NUM_HEADS * S)


def build_head_selectors(D, S):
    """0/1 bf16 selectors: selK[d, h*S+j] = selV[h*S+j, d] = (d // Dh == h)."""
    Dh = D // NUM_HEADS
    d = jnp.arange(D)[:, None] // Dh
    h = jnp.arange(NUM_HEADS * S)[None, :] // S
    selK = (d == h).astype(jnp.bfloat16)                                 # (D, H*S)
    return selK, selK.T                                                  # selV = (H*S, D)


def init_params(key, D):
    """Deterministic synthetic parameters (shapes from the nn.Module __init__)."""
    ks = jax.random.split(key, 6)
    return dict(
        in_proj_w=jax.random.normal(ks[0], (3 * D, D), jnp.float32) * 0.05,
        in_proj_b=jax.random.normal(ks[1], (3 * D,), jnp.float32) * 0.02,
        out_proj_w=jax.random.normal(ks[2], (D, D), jnp.float32) * 0.05,
        out_proj_b=jax.random.normal(ks[3], (D,), jnp.float32) * 0.02,
        ln_gamma=jnp.ones((D,), jnp.float32),
        ln_beta=jnp.zeros((D,), jnp.float32),
        # classifier Linear(2D, 1), kaiming_normal_-style scale sqrt(2/fan_in)
        cls_w=jax.random.normal(ks[4], (1, 2 * D), jnp.float32) * math.sqrt(2.0 / (2 * D)),
        cls_b=jnp.zeros((1,), jnp.float32),
    )


def to_kernel_layout(p, D, S):
    """Re-pack PyTorch-layout params into fused, lane-dense kernel layout."""
    Dh = D // NUM_HEADS
    scale = 1.0 / math.sqrt(Dh)
    wq, wk, wv = jnp.split(p["in_proj_w"], 3, axis=0)      # each (D, D), (out, in)
    bq, bk, bv = jnp.split(p["in_proj_b"], 3)
    # fold the 1/sqrt(Dh) score scale into the Q projection (weight + bias)
    wqkv = jnp.concatenate([wq.T * scale, wk.T, wv.T], axis=1).astype(jnp.bfloat16)  # (D, 3D)
    bqkv = jnp.concatenate([bq * scale, bk, bv]).reshape(1, 3 * D)
    wo = p["out_proj_w"].T.astype(jnp.bfloat16)            # (D, D)
    bo = p["out_proj_b"].reshape(1, D)
    gamma = p["ln_gamma"].reshape(1, D)
    beta = p["ln_beta"].reshape(1, D)
    wc = p["cls_w"].reshape(2, D)                          # row 0: max-pool, row 1: mean-pool
    bc = p["cls_b"].reshape(1, 1)
    selK, selV = build_head_selectors(D, S)
    return (selK, selV, wqkv, bqkv, wo, bo, gamma, beta, wc, bc)


# pure-JAX f32 reference of the same forward pass (for validation only)
def reference(x, attention_mask, p):
    B, S, D = x.shape
    H, Dh = NUM_HEADS, D // NUM_HEADS
    qkv = x @ p["in_proj_w"].T + p["in_proj_b"]
    q, k, v = jnp.split(qkv, 3, axis=-1)

    def heads(t):
        return t.reshape(B, S, H, Dh).transpose(0, 2, 1, 3)

    q, k, v = heads(q), heads(k), heads(v)
    mask_bh = build_multihead_mask(attention_mask)
    scores = jnp.einsum("bhie,bhje->bhij", q, k) / math.sqrt(Dh) + mask_bh[:, :, None, :]
    pw = jax.nn.softmax(scores, axis=-1)
    attn = jnp.einsum("bhij,bhje->bhie", pw, v)
    attn = attn.transpose(0, 2, 1, 3).reshape(B, S, D)
    out = attn @ p["out_proj_w"].T + p["out_proj_b"]
    y = out + x
    mu = y.mean(-1, keepdims=True)
    var = ((y - mu) ** 2).mean(-1, keepdims=True)
    yn = (y - mu) / jnp.sqrt(var + LN_EPS) * p["ln_gamma"] + p["ln_beta"]
    pooled = jnp.concatenate([yn.max(axis=1), yn.mean(axis=1)], axis=1)
    return pooled @ p["cls_w"].T + p["cls_b"]


# ----------------------------------------------------------------------------- main
if __name__ == "__main__":
    B, S, D = 2, 8, 64            # d_model=64, 16 heads -> head_dim=4
    VOCAB = 97

    key = jax.random.PRNGKey(0)
    k_emb, k_ids, k_par = jax.random.split(key, 3)

    # TODO(synk): the pretrained T5EncoderModel stack is not translated; a deterministic
    # embedding lookup stands in for self.t5(...).last_hidden_state.
    emb_table = jax.random.normal(k_emb, (VOCAB, D), jnp.float32) * 0.5
    input_ids = jax.random.randint(k_ids, (B, S), 0, VOCAB)
    attention_mask = jnp.array(
        [[1, 1, 1, 1, 1, 1, 0, 0],
         [1, 1, 1, 1, 1, 0, 0, 0]], dtype=jnp.float32)

    last_hidden_state = emb_table[input_ids]                 # (B, S, D)

    params = init_params(k_par, D)
    kparams = to_kernel_layout(params, D, S)
    mask_rows = build_packed_mask_rows(attention_mask)       # (B*S, H*S)

    logits = t5_cross_encoder_head(last_hidden_state, mask_rows, kparams)
    logits = jax.block_until_ready(logits)

    ref = reference(last_hidden_state, attention_mask, params)
    assert logits.shape == (B, 1)
    assert jnp.allclose(logits, ref, atol=5e-2, rtol=5e-2)

    print("KERNEL_OK")
</pallas_src>

<mosaic_0001>
module attributes {stable_mosaic.version = 11 : i64} {
  func.func @_cross_encoder_head_kernel(%arg0: i32, %arg1: memref<8x64xf32, #tpu.memory_space<vmem>>, %arg2: memref<8x128xf32, #tpu.memory_space<vmem>>, %arg3: memref<64x128xbf16, #tpu.memory_space<vmem>>, %arg4: memref<128x64xbf16, #tpu.memory_space<vmem>>, %arg5: memref<64x192xbf16, #tpu.memory_space<vmem>>, %arg6: memref<1x192xf32, #tpu.memory_space<vmem>>, %arg7: memref<64x64xbf16, #tpu.memory_space<vmem>>, %arg8: memref<1x64xf32, #tpu.memory_space<vmem>>, %arg9: memref<1x64xf32, #tpu.memory_space<vmem>>, %arg10: memref<1x64xf32, #tpu.memory_space<vmem>>, %arg11: memref<2x64xf32, #tpu.memory_space<vmem>>, %arg12: memref<1x1xf32, #tpu.memory_space<vmem>>, %arg13: memref<8x1xf32, #tpu.memory_space<vmem>>, %arg14: memref<8x64xbf16, #tpu.memory_space<vmem>>, %arg15: memref<1x64x8xbf16, #tpu.memory_space<vmem>>, %arg16: memref<8x64xbf16, #tpu.memory_space<vmem>>, %arg17: memref<8x128xbf16, #tpu.memory_space<vmem>>, %arg18: memref<8x64xf32, #tpu.memory_space<vmem>>) attributes {dimension_semantics = [#tpu.dimension_semantics<parallel>], iteration_bounds = array<i64: 2>, scalar_prefetch = 0 : i64, scratch_operands = 5 : i64, tpu.core_type = #tpu.core_type<tc>, window_params = [{transform_indices = @transform_0, window_bounds = array<i64: 8, 64>}, {transform_indices = @transform_1, window_bounds = array<i64: 8, 128>}, {pipeline_mode = #tpu.pipeline_mode<synchronous>, transform_indices = @transform_2, window_bounds = array<i64: 64, 128>}, {pipeline_mode = #tpu.pipeline_mode<synchronous>, transform_indices = @transform_3, window_bounds = array<i64: 128, 64>}, {pipeline_mode = #tpu.pipeline_mode<synchronous>, transform_indices = @transform_4, window_bounds = array<i64: 64, 192>}, {pipeline_mode = #tpu.pipeline_mode<synchronous>, transform_indices = @transform_5, window_bounds = array<i64: 1, 192>}, {pipeline_mode = #tpu.pipeline_mode<synchronous>, transform_indices = @transform_6, window_bounds = array<i64: 64, 64>}, {pipeline_mode = #tpu.pipeline_mode<synchronous>, transform_indices = @transform_7, window_bounds = array<i64: 1, 64>}, {pipeline_mode = #tpu.pipeline_mode<synchronous>, transform_indices = @transform_8, window_bounds = array<i64: 1, 64>}, {pipeline_mode = #tpu.pipeline_mode<synchronous>, transform_indices = @transform_9, window_bounds = array<i64: 1, 64>}, {pipeline_mode = #tpu.pipeline_mode<synchronous>, transform_indices = @transform_10, window_bounds = array<i64: 2, 64>}, {pipeline_mode = #tpu.pipeline_mode<synchronous>, transform_indices = @transform_11, window_bounds = array<i64: 1, 1>}, {transform_indices = @transform_12, window_bounds = array<i64: 8, 1>}]} {
    %c0 = arith.constant 0 : index
    %c0_0 = arith.constant 0 : index
    %0 = vector.load %arg1[%c0, %c0_0] : memref<8x64xf32, #tpu.memory_space<vmem>>, vector<8x64xf32>
    %1 = arith.truncf %0 : vector<8x64xf32> to vector<8x64xbf16>
    %c0_1 = arith.constant 0 : index
    %c0_2 = arith.constant 0 : index
    %2 = vector.load %arg5[%c0_1, %c0_2] : memref<64x192xbf16, #tpu.memory_space<vmem>>, vector<64x192xbf16>
    %cst = arith.constant dense<0.000000e+00> : vector<8x192xf32>
    %3 = tpu.matmul %1, %2, %cst {dimension_numbers = #tpu.dot_dimension_numbers<[1], [0], [0], [1], [0, 0, 1, 1], [], []>} : vector<8x64xbf16>, vector<64x192xbf16>, vector<8x192xf32> -> vector<8x192xf32>
    %c0_3 = arith.constant 0 : index
    %c0_4 = arith.constant 0 : index
    %4 = vector.load %arg6[%c0_3, %c0_4] : memref<1x192xf32, #tpu.memory_space<vmem>>, vector<1x192xf32>
    %5 = vector.broadcast %4 : vector<1x192xf32> to vector<8x192xf32>
    %6 = arith.addf %3, %5 : vector<8x192xf32>
    %7 = vector.extract_strided_slice %6 {offsets = [0, 0], sizes = [8, 64], strides = [1, 1]} : vector<8x192xf32> to vector<8x64xf32>
    %8 = arith.truncf %7 : vector<8x64xf32> to vector<8x64xbf16>
    %c0_5 = arith.constant 0 : index
    %c0_6 = arith.constant 0 : index
    %9 = vector.load %arg14[%c0_5, %c0_6] : memref<8x64xbf16, #tpu.memory_space<vmem>>, vector<8x64xbf16>
    tpu.vector_store %arg14[%c0_5, %c0_6], %8 {strides = array<i32>} : memref<8x64xbf16, #tpu.memory_space<vmem>>, vector<8x64xbf16>,
    %10 = vector.extract_strided_slice %6 {offsets = [0, 128], sizes = [8, 64], strides = [1, 1]} : vector<8x192xf32> to vector<8x64xf32>
    %11 = arith.truncf %10 : vector<8x64xf32> to vector<8x64xbf16>
    %c0_7 = arith.constant 0 : index
    %c0_8 = arith.constant 0 : index
    %12 = vector.load %arg16[%c0_7, %c0_8] : memref<8x64xbf16, #tpu.memory_space<vmem>>, vector<8x64xbf16>
    tpu.vector_store %arg16[%c0_7, %c0_8], %11 {strides = array<i32>} : memref<8x64xbf16, #tpu.memory_space<vmem>>, vector<8x64xbf16>,
    %13 = vector.extract_strided_slice %6 {offsets = [0, 64], sizes = [8, 64], strides = [1, 1]} : vector<8x192xf32> to vector<8x64xf32>
    %14 = tpu.transpose %13, [1, 0] : vector<8x64xf32> -> vector<64x8xf32>
    %15 = arith.truncf %14 : vector<64x8xf32> to vector<64x8xbf16>
    %c0_9 = arith.constant 0 : index
    %c0_10 = arith.constant 0 : index
    %c0_11 = arith.constant 0 : index
    %16 = vector.load %arg15[%c0_9, %c0_10, %c0_11] : memref<1x64x8xbf16, #tpu.memory_space<vmem>>, vector<1x64x8xbf16>
    %17 = vector.shape_cast %16 : vector<1x64x8xbf16> to vector<64x8xbf16>
    %18 = vector.shape_cast %15 : vector<64x8xbf16> to vector<1x64x8xbf16>
    tpu.vector_store %arg15[%c0_9, %c0_10, %c0_11], %18 {strides = array<i32>} : memref<1x64x8xbf16, #tpu.memory_space<vmem>>, vector<1x64x8xbf16>,
    %c0_i32 = arith.constant 0 : i32
    %c8_i32 = arith.constant 8 : i32
    %19 = arith.muli %c0_i32, %c8_i32 : i32
    %20 = tpu.assume_multiple %19, 8 : i32
    %21 = arith.index_cast %20 : i32 to index
    %c0_12 = arith.constant 0 : index
    %22 = vector.load %arg14[%21, %c0_12] : memref<8x64xbf16, #tpu.memory_space<vmem>>, vector<8x64xbf16>
    %23 = arith.index_cast %20 : i32 to index
    %c0_13 = arith.constant 0 : index
    %24 = vector.load %arg16[%23, %c0_13] : memref<8x64xbf16, #tpu.memory_space<vmem>>, vector<8x64xbf16>
    %25 = arith.index_cast %c0_i32 : i32 to index
    %c0_14 = arith.constant 0 : index
    %c0_15 = arith.constant 0 : index
    %26 = vector.load %arg15[%25, %c0_14, %c0_15] : memref<1x64x8xbf16, #tpu.memory_space<vmem>>, vector<1x64x8xbf16>
    %27 = vector.shape_cast %26 : vector<1x64x8xbf16> to vector<64x8xbf16>
    %c0_16 = arith.constant 0 : index
    %c0_17 = arith.constant 0 : index
    %28 = vector.load %arg3[%c0_16, %c0_17] : memref<64x128xbf16, #tpu.memory_space<vmem>>, vector<64x128xbf16>
    %c0_18 = arith.constant 0 : index
    %c0_19 = arith.constant 0 : index
    %29 = vector.load %arg4[%c0_18, %c0_19] : memref<128x64xbf16, #tpu.memory_space<vmem>>, vector<128x64xbf16>
    %30 = tpu.concatenate %27, %27, %27, %27, %27, %27, %27, %27, %27, %27, %27, %27, %27, %27, %27, %27 in 1 : vector<64x8xbf16>, vector<64x8xbf16>, vector<64x8xbf16>, vector<64x8xbf16>, vector<64x8xbf16>, vector<64x8xbf16>, vector<64x8xbf16>, vector<64x8xbf16>, vector<64x8xbf16>, vector<64x8xbf16>, vector<64x8xbf16>, vector<64x8xbf16>, vector<64x8xbf16>, vector<64x8xbf16>, vector<64x8xbf16>, vector<64x8xbf16> -> vector<64x128xbf16>
    %31 = arith.mulf %30, %28 : vector<64x128xbf16>
    %32 = tpu.concatenate %24, %24, %24, %24, %24, %24, %24, %24, %24, %24, %24, %24, %24, %24, %24, %24 in 0 : vector<8x64xbf16>, vector<8x64xbf16>, vector<8x64xbf16>, vector<8x64xbf16>, vector<8x64xbf16>, vector<8x64xbf16>, vector<8x64xbf16>, vector<8x64xbf16>, vector<8x64xbf16>, vector<8x64xbf16>, vector<8x64xbf16>, vector<8x64xbf16>, vector<8x64xbf16>, vector<8x64xbf16>, vector<8x64xbf16>, vector<8x64xbf16> -> vector<128x64xbf16>
    %33 = arith.mulf %32, %29 : vector<128x64xbf16>
    %cst_20 = arith.constant dense<0.000000e+00> : vector<8x128xf32>
    %34 = tpu.matmul %22, %31, %cst_20 {dimension_numbers = #tpu.dot_dimension_numbers<[1], [0], [0], [1], [0, 0, 1, 1], [], []>} : vector<8x64xbf16>, vector<64x128xbf16>, vector<8x128xf32> -> vector<8x128xf32>
    %35 = arith.index_cast %20 : i32 to index
    %c0_21 = arith.constant 0 : index
    %36 = vector.load %arg2[%35, %c0_21] : memref<8x128xf32, #tpu.memory_space<vmem>>, vector<8x128xf32>
    %37 = arith.addf %34, %36 : vector<8x128xf32>
    %cst_22 = arith.constant dense<0xFF800000> : vector<8xf32>
    %38 = vector.multi_reduction <maximumf>, %37, %cst_22 [1] : vector<8x128xf32> to vector<8xf32>
    %39 = vector.shape_cast %38 : vector<8xf32> to vector<8x1xf32>
    %40 = vector.broadcast %39 : vector<8x1xf32> to vector<8x128xf32>
    %41 = arith.subf %37, %40 : vector<8x128xf32>
    %42 = math.exp %41 : vector<8x128xf32>
    %43 = arith.truncf %42 : vector<8x128xf32> to vector<8x128xbf16>
    %44 = arith.index_cast %20 : i32 to index
    %c0_23 = arith.constant 0 : index
    %45 = vector.load %arg17[%44, %c0_23] : memref<8x128xbf16, #tpu.memory_space<vmem>>, vector<8x128xbf16>
    tpu.vector_store %arg17[%44, %c0_23], %43 {strides = array<i32>} : memref<8x128xbf16, #tpu.memory_space<vmem>>, vector<8x128xbf16>,
    %cst_24 = arith.constant dense<0.000000e+00> : vector<8x64xf32>
    %46 = tpu.matmul %43, %33, %cst_24 {dimension_numbers = #tpu.dot_dimension_numbers<[1], [0], [0], [1], [0, 0, 1, 1], [], []>} : vector<8x128xbf16>, vector<128x64xbf16>, vector<8x64xf32> -> vector<8x64xf32>
    %47 = arith.index_cast %20 : i32 to index
    %c0_25 = arith.constant 0 : index
    %48 = vector.load %arg18[%47, %c0_25] : memref<8x64xf32, #tpu.memory_space<vmem>>, vector<8x64xf32>
    tpu.vector_store %arg18[%47, %c0_25], %46 {strides = array<i32>} : memref<8x64xf32, #tpu.memory_space<vmem>>, vector<8x64xf32>,
    %c1_i32 = arith.constant 1 : i32
    %c0_26 = arith.constant 0 : index
    %c0_27 = arith.constant 0 : index
    %49 = vector.load %arg17[%c0_26, %c0_27] : memref<8x128xbf16, #tpu.memory_space<vmem>>, vector<8x128xbf16>
    %c0_28 = arith.constant 0 : index
    %c0_29 = arith.constant 0 : index
    %50 = vector.load %arg4[%c0_28, %c0_29] : memref<128x64xbf16, #tpu.memory_space<vmem>>, vector<128x64xbf16>
    %cst_30 = arith.constant dense<0.000000e+00> : vector<8x64xf32>
    %51 = tpu.matmul %49, %50, %cst_30 {dimension_numbers = #tpu.dot_dimension_numbers<[1], [0], [0], [1], [0, 0, 1, 1], [], []>} : vector<8x128xbf16>, vector<128x64xbf16>, vector<8x64xf32> -> vector<8x64xf32>
    %cst_31 = arith.constant 1.000000e-30 : f32
    %52 = vector.broadcast %cst_31 : f32 to vector<8x64xf32>
    %53 = arith.maximumf %51, %52 : vector<8x64xf32>
    %c0_32 = arith.constant 0 : index
    %c0_33 = arith.constant 0 : index
    %54 = vector.load %arg18[%c0_32, %c0_33] : memref<8x64xf32, #tpu.memory_space<vmem>>, vector<8x64xf32>
    %55 = tpu.reciprocal %53 {approx = true} : vector<8x64xf32> -> vector<8x64xf32>
    %56 = arith.mulf %54, %55 : vector<8x64xf32>
    %57 = arith.truncf %56 : vector<8x64xf32> to vector<8x64xbf16>
    %c0_34 = arith.constant 0 : index
    %c0_35 = arith.constant 0 : index
    %58 = vector.load %arg7[%c0_34, %c0_35] : memref<64x64xbf16, #tpu.memory_space<vmem>>, vector<64x64xbf16>
    %cst_36 = arith.constant dense<0.000000e+00> : vector<8x64xf32>
    %59 = tpu.matmul %57, %58, %cst_36 {dimension_numbers = #tpu.dot_dimension_numbers<[1], [0], [0], [1], [0, 0, 1, 1], [], []>} : vector<8x64xbf16>, vector<64x64xbf16>, vector<8x64xf32> -> vector<8x64xf32>
    %c0_37 = arith.constant 0 : index
    %c0_38 = arith.constant 0 : index
    %60 = vector.load %arg8[%c0_37, %c0_38] : memref<1x64xf32, #tpu.memory_space<vmem>>, vector<1x64xf32>
    %61 = vector.broadcast %60 : vector<1x64xf32> to vector<8x64xf32>
    %62 = arith.addf %59, %61 : vector<8x64xf32>
    %c0_39 = arith.constant 0 : index
    %c0_40 = arith.constant 0 : index
    %63 = vector.load %arg1[%c0_39, %c0_40] : memref<8x64xf32, #tpu.memory_space<vmem>>, vector<8x64xf32>
    %64 = arith.addf %62, %63 : vector<8x64xf32>
    %cst_41 = arith.constant dense<0.000000e+00> : vector<8xf32>
    %65 = vector.multi_reduction <add>, %64, %cst_41 [1] : vector<8x64xf32> to vector<8xf32>
    %66 = vector.shape_cast %65 : vector<8xf32> to vector<8x1xf32>
    %cst_42 = arith.constant 6.400000e+01 : f32
    %67 = vector.broadcast %cst_42 : f32 to vector<8x1xf32>
    %68 = arith.divf %66, %67 : vector<8x1xf32>
    %69 = vector.broadcast %68 : vector<8x1xf32> to vector<8x64xf32>
    %70 = arith.subf %64, %69 : vector<8x64xf32>
    %71 = arith.mulf %70, %70 : vector<8x64xf32>
    %cst_43 = arith.constant dense<0.000000e+00> : vector<8xf32>
    %72 = vector.multi_reduction <add>, %71, %cst_43 [1] : vector<8x64xf32> to vector<8xf32>
    %73 = vector.shape_cast %72 : vector<8xf32> to vector<8x1xf32>
    %cst_44 = arith.constant 6.400000e+01 : f32
    %74 = vector.broadcast %cst_44 : f32 to vector<8x1xf32>
    %75 = arith.divf %73, %74 : vector<8x1xf32>
    %76 = vector.broadcast %68 : vector<8x1xf32> to vector<8x64xf32>
    %77 = arith.subf %64, %76 : vector<8x64xf32>
    %cst_45 = arith.constant 9.99999974E-6 : f32
    %78 = vector.broadcast %cst_45 : f32 to vector<8x1xf32>
    %79 = arith.addf %75, %78 : vector<8x1xf32>
    %80 = math.rsqrt %79 : vector<8x1xf32>
    %81 = vector.broadcast %80 : vector<8x1xf32> to vector<8x64xf32>
    %82 = arith.mulf %77, %81 : vector<8x64xf32>
    %c0_46 = arith.constant 0 : index
    %c0_47 = arith.constant 0 : index
    %83 = vector.load %arg9[%c0_46, %c0_47] : memref<1x64xf32, #tpu.memory_space<vmem>>, vector<1x64xf32>
    %84 = vector.broadcast %83 : vector<1x64xf32> to vector<8x64xf32>
    %85 = arith.mulf %82, %84 : vector<8x64xf32>
    %c0_48 = arith.constant 0 : index
    %c0_49 = arith.constant 0 : index
    %86 = vector.load %arg10[%c0_48, %c0_49] : memref<1x64xf32, #tpu.memory_space<vmem>>, vector<1x64xf32>
    %87 = vector.broadcast %86 : vector<1x64xf32> to vector<8x64xf32>
    %88 = arith.addf %85, %87 : vector<8x64xf32>
    %89 = vector.shape_cast %88 : vector<8x64xf32> to vector<1x8x64xf32>
    %cst_50 = arith.constant dense<0xFF800000> : vector<1x64xf32>
    %90 = vector.multi_reduction <maximumf>, %89, %cst_50 [1] : vector<1x8x64xf32> to vector<1x64xf32>
    %cst_51 = arith.constant dense<0.000000e+00> : vector<1x64xf32>
    %91 = vector.multi_reduction <add>, %89, %cst_51 [1] : vector<1x8x64xf32> to vector<1x64xf32>
    %cst_52 = arith.constant 8.000000e+00 : f32
    %92 = vector.broadcast %cst_52 : f32 to vector<1x64xf32>
    %93 = arith.divf %91, %92 : vector<1x64xf32>
    %c0_53 = arith.constant 0 : index
    %c0_54 = arith.constant 0 : index
    %94 = vector.load %arg11[%c0_53, %c0_54] : memref<2x64xf32, #tpu.memory_space<vmem>>, vector<1x64xf32>
    %95 = arith.mulf %90, %94 : vector<1x64xf32>
    %cst_55 = arith.constant dense<0.000000e+00> : vector<1xf32>
    %96 = vector.multi_reduction <add>, %95, %cst_55 [1] : vector<1x64xf32> to vector<1xf32>
    %97 = vector.shape_cast %96 : vector<1xf32> to vector<1x1xf32>
    %c1 = arith.constant 1 : index
    %c0_56 = arith.constant 0 : index
    %98 = vector.load %arg11[%c1, %c0_56] : memref<2x64xf32, #tpu.memory_space<vmem>>, vector<1x64xf32>
    %99 = arith.mulf %93, %98 : vector<1x64xf32>
    %cst_57 = arith.constant dense<0.000000e+00> : vector<1xf32>
    %100 = vector.multi_reduction <add>, %99, %cst_57 [1] : vector<1x64xf32> to vector<1xf32>
    %101 = vector.shape_cast %100 : vector<1xf32> to vector<1x1xf32>
    %102 = arith.addf %97, %101 : vector<1x1xf32>
    %c0_58 = arith.constant 0 : index
    %c0_59 = arith.constant 0 : index
    %103 = vector.load %arg12[%c0_58, %c0_59] : memref<1x1xf32, #tpu.memory_space<vmem>>, vector<1x1xf32>
    %104 = arith.addf %102, %103 : vector<1x1xf32>
    %105 = vector.shape_cast %104 : vector<1x1xf32> to vector<1x1xf32>
    %106 = vector.broadcast %105 : vector<1x1xf32> to vector<8x1xf32>
    %c0_60 = arith.constant 0 : index
    %c0_61 = arith.constant 0 : index
    %107 = vector.load %arg13[%c0_60, %c0_61] : memref<8x1xf32, #tpu.memory_space<vmem>>, vector<8x1xf32>
    tpu.vector_store %arg13[%c0_60, %c0_61], %106 {strides = array<i32>} : memref<8x1xf32, #tpu.memory_space<vmem>>, vector<8x1xf32>,
    return
  }
  func.func @transform_0(%arg0: i32) -> (i32, i32) {
    %c0_i32 = arith.constant 0 : i32
    %c0_i32_0 = arith.constant 0 : i32
    return %arg0, %c0_i32 : i32, i32
  }
  func.func @transform_1(%arg0: i32) -> (i32, i32) {
    %c0_i32 = arith.constant 0 : i32
    %c0_i32_0 = arith.constant 0 : i32
    return %arg0, %c0_i32 : i32, i32
  }
  func.func @transform_2(%arg0: i32) -> (i32, i32) {
    %c0_i32 = arith.constant 0 : i32
    %c0_i32_0 = arith.constant 0 : i32
    %c0_i32_1 = arith.constant 0 : i32
    return %c0_i32, %c0_i32_0 : i32, i32
  }
  func.func @transform_3(%arg0: i32) -> (i32, i32) {
    %c0_i32 = arith.constant 0 : i32
    %c0_i32_0 = arith.constant 0 : i32
    %c0_i32_1 = arith.constant 0 : i32
    return %c0_i32, %c0_i32_0 : i32, i32
  }
  func.func @transform_4(%arg0: i32) -> (i32, i32) {
    %c0_i32 = arith.constant 0 : i32
    %c0_i32_0 = arith.constant 0 : i32
    %c0_i32_1 = arith.constant 0 : i32
    return %c0_i32, %c0_i32_0 : i32, i32
  }
  func.func @transform_5(%arg0: i32) -> (i32, i32) {
    %c0_i32 = arith.constant 0 : i32
    %c0_i32_0 = arith.constant 0 : i32
    %c0_i32_1 = arith.constant 0 : i32
    return %c0_i32, %c0_i32_0 : i32, i32
  }
  func.func @transform_6(%arg0: i32) -> (i32, i32) {
    %c0_i32 = arith.constant 0 : i32
    %c0_i32_0 = arith.constant 0 : i32
    %c0_i32_1 = arith.constant 0 : i32
    return %c0_i32, %c0_i32_0 : i32, i32
  }
  func.func @transform_7(%arg0: i32) -> (i32, i32) {
    %c0_i32 = arith.constant 0 : i32
    %c0_i32_0 = arith.constant 0 : i32
    %c0_i32_1 = arith.constant 0 : i32
    return %c0_i32, %c0_i32_0 : i32, i32
  }
  func.func @transform_8(%arg0: i32) -> (i32, i32) {
    %c0_i32 = arith.constant 0 : i32
    %c0_i32_0 = arith.constant 0 : i32
    %c0_i32_1 = arith.constant 0 : i32
    return %c0_i32, %c0_i32_0 : i32, i32
  }
  func.func @transform_9(%arg0: i32) -> (i32, i32) {
    %c0_i32 = arith.constant 0 : i32
    %c0_i32_0 = arith.constant 0 : i32
    %c0_i32_1 = arith.constant 0 : i32
    return %c0_i32, %c0_i32_0 : i32, i32
  }
  func.func @transform_10(%arg0: i32) -> (i32, i32) {
    %c0_i32 = arith.constant 0 : i32
    %c0_i32_0 = arith.constant 0 : i32
    %c0_i32_1 = arith.constant 0 : i32
    return %c0_i32, %c0_i32_0 : i32, i32
  }
  func.func @transform_11(%arg0: i32) -> (i32, i32) {
    %c0_i32 = arith.constant 0 : i32
    %c0_i32_0 = arith.constant 0 : i32
    %c0_i32_1 = arith.constant 0 : i32
    return %c0_i32, %c0_i32_0 : i32, i32
  }
  func.func @transform_12(%arg0: i32) -> (i32, i32) {
    %c0_i32 = arith.constant 0 : i32
    %c0_i32_0 = arith.constant 0 : i32
    return %arg0, %c0_i32 : i32, i32
  }
}

</mosaic_0001>

<llo_original>
// kernel: tpu_custom_call.1
$region0: #{tpu_custom_call.1}
  #allocation0 [shape = 'u32[]', space=smem, size = 0x4, offset = 0x4, fixed_abs, tag = 'smem constant byte address 0x4 - core index']
  #allocation1 [shape = 'u32[144,128]{1,0:T(1,128)}', space=vmem, size = 0x12000, scoped, tag = 'internal scratch']
  #allocation2 [shape = 'bf16[8,64]{1,0:T(8,128)(2,1)}', space=vmem, size = 0x800, scoped, tag = 'scratch operand']
  #allocation3 [shape = 'bf16[1,64,8]{2,1,0:T(16,128)(2,1)}', space=vmem, size = 0x4000, scoped, tag = 'scratch operand']
  #allocation4 [shape = 'bf16[8,64]{1,0:T(8,128)(2,1)}', space=vmem, size = 0x800, scoped, tag = 'scratch operand']
  #allocation5 [shape = 'bf16[8,128]{1,0:T(8,128)(2,1)}', space=vmem, size = 0x800, scoped, tag = 'scratch operand']
  #allocation6 [shape = 'f32[8,64]{1,0:T(8,128)}', space=vmem, size = 0x1000, scoped, tag = 'scratch operand']
  #allocation7 [shape = 'f32[1,1]{1,0:T(1,128)S(1)}', space=vmem, size = 0x200, scoped, tag = 'scoped memory for tpu_custom_call.1']
  %s0 = inlined_call_operand.vmem [shape: f32[16,64], index: 0, kind: input, shape index: {}]
  %s1 = inlined_call_operand.hbm [shape: f32[16,128], index: 1, kind: input, shape index: {}]
  %s2 = inlined_call_operand.vmem [shape: bf16[64,128], index: 2, kind: input, shape index: {}]
  %s3 = inlined_call_operand.vmem [shape: bf16[128,64], index: 3, kind: input, shape index: {}]
  %s4 = inlined_call_operand.vmem [shape: bf16[64,192], index: 4, kind: input, shape index: {}]
  %s5 = inlined_call_operand.vmem [shape: f32[1,192], index: 5, kind: input, shape index: {}]
  %s6 = inlined_call_operand.hbm [shape: bf16[64,64], index: 6, kind: input, shape index: {}]
  %s7 = inlined_call_operand.vmem [shape: f32[1,64], index: 7, kind: input, shape index: {}]
  %s8 = inlined_call_operand.vmem [shape: f32[1,64], index: 8, kind: input, shape index: {}]
  %s9 = inlined_call_operand.vmem [shape: f32[1,64], index: 9, kind: input, shape index: {}]
  %s10 = inlined_call_operand.vmem [shape: f32[2,64], index: 10, kind: input, shape index: {}]
  %s11 = inlined_call_operand.<no memory space> [shape: f32[1,1], index: 11, kind: input, shape index: {}]
  %s12 = inlined_call_operand.vmem [shape: f32[16,1], index: 12, kind: output, shape index: {}]
  %s13 = sld [smem:[#allocation0]]
  $region89: #{tpu_custom_call.1} parent=0
    _
  %s15 = ssub.s32 1, %s13
  %s16 = scalar_select 0, %s15, %s13
  %v17 = vstv %s11
  %18 = vst [vmem:[#allocation7] sm:$0x1] %v17
  $region1: #{tpu_custom_call.1} parent=0
    #allocation8 [shape = 'u8[8192]{0}', space=vmem, size = 0x2000, scoped, tag = 'input window, operand 1']
    #allocation9 [shape = 's32[2]{0}', space=sflag, size = 0x8, scoped, tag = 'scoped memory for tpu_custom_call.1']
    #allocation10 [shape = 'u8[16384]{0}', space=vmem, size = 0x4000, scoped, tag = 'input window, operand 6, single buffered']
    #allocation11 [shape = 's32[1]{0}', space=sflag, size = 0x4, scoped, tag = 'scoped memory for tpu_custom_call.1']
    %19 = vsyncpa [#allocation9], 0
    %s20 = scalar_lea.sflag [#allocation9], 1
    %21 = vsyncpa %s20, 0
    %22 = vsyncpa [#allocation11], 0
    loop: start=0, step=1, limit=4
    $region2: #{tpu_custom_call.1} parent=1 // loop_pre_header
      _
    $region3: #{tpu_custom_call.1} parent=1 // loop_header
      %s24 = sphi 0, %s28
      %p25 = scmp.ge.s32.totalorder %s24, 4
      %s34 = sphi 0, %s36
      %s37 = sphi 0, %s34
      %s38 = sphi 0, %s37
      %s54 = sphi 0, %s38
      %s60 = sphi 0, %s62
      %s63 = sphi 0, %s60
      %s64 = sphi 0, %s63
      %s80 = sphi 0, %s64
      %s84 = sphi 0, %s84
      %s86 = sphi 0, %s84
      %s87 = sphi 0, %s86
      %s101 = sphi 0, %s87
      %s105 = sphi 0, %s105
      %s107 = sphi 0, %s105
      %s108 = sphi 0, %s107
      %s122 = sphi 0, %s108
      %s126 = sphi 0, %s126
      %s128 = sphi 0, %s126
      %s129 = sphi 0, %s128
      %s143 = sphi 0, %s129
      %s147 = sphi 0, %s147
      %s149 = sphi 0, %s147
      %s150 = sphi 0, %s149
      %s164 = sphi 0, %s150
      %s168 = sphi 0, %s168
      %s170 = sphi 0, %s168
      %s171 = sphi 0, %s170
      %s185 = sphi 0, %s171
      %s189 = sphi 0, %s189
      %s191 = sphi 0, %s189
      %s192 = sphi 0, %s191
      %s206 = sphi 0, %s192
      %s210 = sphi 0, %s210
      %s212 = sphi 0, %s210
      %s213 = sphi 0, %s212
      %s227 = sphi 0, %s213
      %s231 = sphi 0, %s231
      %s233 = sphi 0, %s231
      %s234 = sphi 0, %s233
      %s248 = sphi 0, %s234
      %s252 = sphi 0, %s252
      %s254 = sphi 0, %s252
      %s255 = sphi 0, %s254
      %s269 = sphi 0, %s255
      %s273 = sphi 0, %s273
      %s275 = sphi 0, %s273
      %s276 = sphi 0, %s275
      %s290 = sphi 0, %s276
      %s296 = sphi 0, %s298
      %s299 = sphi 0, %s296
      %s300 = sphi 0, %s299
      %s316 = sphi 0, %s300
    $region4: #{tpu_custom_call.1} parent=1 // loop_header_branch
      %27 = sbr.rel (%p25) target = $region8
    $region5: #{tpu_custom_call.1} parent=1 // loop_body
      %s29 = ssub.s32 %s24, 1
      %s30 = ssub.s32 %s24, 2
      %s31 = sadd.s32 %s24, 1
      %s32 = ssub.s32 %s24, %s31
      %p33 = scmp.eq.s32.totalorder %s32, 0
      %s35 = sadd.s32 %s34, 1
      %s36 = scalar_select %p33, %s34, %s35
      %p39 = pneg %p33
      %p40 = scmp.eq.s32.totalorder %s24, 1
      %p41 = por %p39, %p40
      %p42 = scmp.ne.s32.totalorder %s34, %s37
      %p43 = scmp.eq.s32.totalorder %s24, 0
      %p44 = por %p42, %p43
      %p45 = scmp.ne.s32.totalorder %s34, %s37
      %p46 = scmp.eq.s32.totalorder %s29, 1
      %p47 = por %p45, %p46
      %p48 = scmp.ne.s32.totalorder %s37, %s38
      %p49 = scmp.eq.s32.totalorder %s29, 0
      %p50 = por %p48, %p49
      %p51 = scmp.ne.s32.totalorder %s37, %s38
      %p52 = scmp.eq.s32.totalorder %s30, 1
      %p53 = por %p51, %p52
      %p55 = scmp.ne.s32.totalorder %s38, %s54
      %p56 = scmp.eq.s32.totalorder %s30, 0
      %p57 = por %p55, %p56
      %s58 = ssub.s32 %s24, %s31
      %p59 = scmp.eq.s32.totalorder %s58, 0
      %s61 = sadd.s32 %s60, 1
      %s62 = scalar_select %p59, %s60, %s61
      %p65 = pneg %p59
      %p66 = scmp.eq.s32.totalorder %s24, 1
      %p67 = por %p65, %p66
      %p68 = scmp.ne.s32.totalorder %s60, %s63
      %p69 = scmp.eq.s32.totalorder %s24, 0
      %p70 = por %p68, %p69
      %p71 = scmp.ne.s32.totalorder %s60, %s63
      %p72 = scmp.eq.s32.totalorder %s29, 1
      %p73 = por %p71, %p72
      %p74 = scmp.ne.s32.totalorder %s63, %s64
      %p75 = scmp.eq.s32.totalorder %s29, 0
      %p76 = por %p74, %p75
      %p77 = scmp.ne.s32.totalorder %s63, %s64
      %p78 = scmp.eq.s32.totalorder %s30, 1
      %p79 = por %p77, %p78
      %p81 = scmp.ne.s32.totalorder %s64, %s80
      %p82 = scmp.eq.s32.totalorder %s30, 0
      %p83 = por %p81, %p82
      %s85 = sadd.s32 %s84, 1
      %p88 = scmp.eq.s32.totalorder %s24, 1
      %p89 = scmp.ne.s32.totalorder %s84, %s86
      %p90 = scmp.eq.s32.totalorder %s24, 0
      %p91 = por %p89, %p90
      %p92 = scmp.ne.s32.totalorder %s84, %s86
      %p93 = scmp.eq.s32.totalorder %s29, 1
      %p94 = por %p92, %p93
      %p95 = scmp.ne.s32.totalorder %s86, %s87
      %p96 = scmp.eq.s32.totalorder %s29, 0
      %p97 = por %p95, %p96
      %p98 = scmp.ne.s32.totalorder %s86, %s87
      %p99 = scmp.eq.s32.totalorder %s30, 1
      %p100 = por %p98, %p99
      %p102 = scmp.ne.s32.totalorder %s87, %s101
      %p103 = scmp.eq.s32.totalorder %s30, 0
      %p104 = por %p102, %p103
      %s106 = sadd.s32 %s105, 1
      %p109 = scmp.eq.s32.totalorder %s24, 1
      %p110 = scmp.ne.s32.totalorder %s105, %s107
      %p111 = scmp.eq.s32.totalorder %s24, 0
      %p112 = por %p110, %p111
      %p113 = scmp.ne.s32.totalorder %s105, %s107
      %p114 = scmp.eq.s32.totalorder %s29, 1
      %p115 = por %p113, %p114
      %p116 = scmp.ne.s32.totalorder %s107, %s108
      %p117 = scmp.eq.s32.totalorder %s29, 0
      %p118 = por %p116, %p117
      %p119 = scmp.ne.s32.totalorder %s107, %s108
      %p120 = scmp.eq.s32.totalorder %s30, 1
      %p121 = por %p119, %p120
      %p123 = scmp.ne.s32.totalorder %s108, %s122
      %p124 = scmp.eq.s32.totalorder %s30, 0
      %p125 = por %p123, %p124
      %s127 = sadd.s32 %s126, 1
      %p130 = scmp.eq.s32.totalorder %s24, 1
      %p131 = scmp.ne.s32.totalorder %s126, %s128
      %p132 = scmp.eq.s32.totalorder %s24, 0
      %p133 = por %p131, %p132
      %p134 = scmp.ne.s32.totalorder %s126, %s128
      %p135 = scmp.eq.s32.totalorder %s29, 1
      %p136 = por %p134, %p135
      %p137 = scmp.ne.s32.totalorder %s128, %s129
      %p138 = scmp.eq.s32.totalorder %s29, 0
      %p139 = por %p137, %p138
      %p140 = scmp.ne.s32.totalorder %s128, %s129
      %p141 = scmp.eq.s32.totalorder %s30, 1
      %p142 = por %p140, %p141
      %p144 = scmp.ne.s32.totalorder %s129, %s143
      %p145 = scmp.eq.s32.totalorder %s30, 0
      %p146 = por %p144, %p145
      %s148 = sadd.s32 %s147, 1
      %p151 = scmp.eq.s32.totalorder %s24, 1
      %p152 = scmp.ne.s32.totalorder %s147, %s149
      %p153 = scmp.eq.s32.totalorder %s24, 0
      %p154 = por %p152, %p153
      %p155 = scmp.ne.s32.totalorder %s147, %s149
      %p156 = scmp.eq.s32.totalorder %s29, 1
      %p157 = por %p155, %p156
      %p158 = scmp.ne.s32.totalorder %s149, %s150
      %p159 = scmp.eq.s32.totalorder %s29, 0
      %p160 = por %p158, %p159
      %p161 = scmp.ne.s32.totalorder %s149, %s150
      %p162 = scmp.eq.s32.totalorder %s30, 1
      %p163 = por %p161, %p162
      %p165 = scmp.ne.s32.totalorder %s150, %s164
      %p166 = scmp.eq.s32.totalorder %s30, 0
      %p167 = por %p165, %p166
      %s169 = sadd.s32 %s168, 1
      %p172 = scmp.eq.s32.totalorder %s24, 1
      %p173 = scmp.ne.s32.totalorder %s168, %s170
      %p174 = scmp.eq.s32.totalorder %s24, 0
      %p175 = por %p173, %p174
      %p176 = scmp.ne.s32.totalorder %s168, %s170
      %p177 = scmp.eq.s32.totalorder %s29, 1
      %p178 = por %p176, %p177
      %p179 = scmp.ne.s32.totalorder %s170, %s171
      %p180 = scmp.eq.s32.totalorder %s29, 0
      %p181 = por %p179, %p180
      %p182 = scmp.ne.s32.totalorder %s170, %s171
      %p183 = scmp.eq.s32.totalorder %s30, 1
      %p184 = por %p182, %p183
      %p186 = scmp.ne.s32.totalorder %s171, %s185
      %p187 = scmp.eq.s32.totalorder %s30, 0
      %p188 = por %p186, %p187
      %s190 = sadd.s32 %s189, 1
      %p193 = scmp.eq.s32.totalorder %s24, 1
      %p194 = scmp.ne.s32.totalorder %s189, %s191
      %p195 = scmp.eq.s32.totalorder %s24, 0
      %p196 = por %p194, %p195
      %p197 = scmp.ne.s32.totalorder %s189, %s191
      %p198 = scmp.eq.s32.totalorder %s29, 1
      %p199 = por %p197, %p198
      %p200 = scmp.ne.s32.totalorder %s191, %s192
      %p201 = scmp.eq.s32.totalorder %s29, 0
      %p202 = por %p200, %p201
      %p203 = scmp.ne.s32.totalorder %s191, %s192
      %p204 = scmp.eq.s32.totalorder %s30, 1
      %p205 = por %p203, %p204
      %p207 = scmp.ne.s32.totalorder %s192, %s206
      %p208 = scmp.eq.s32.totalorder %s30, 0
      %p209 = por %p207, %p208
      %s211 = sadd.s32 %s210, 1
      %p214 = scmp.eq.s32.totalorder %s24, 1
      %p215 = scmp.ne.s32.totalorder %s210, %s212
      %p216 = scmp.eq.s32.totalorder %s24, 0
      %p217 = por %p215, %p216
      %p218 = scmp.ne.s32.totalorder %s210, %s212
      %p219 = scmp.eq.s32.totalorder %s29, 1
      %p220 = por %p218, %p219
      %p221 = scmp.ne.s32.totalorder %s212, %s213
      %p222 = scmp.eq.s32.totalorder %s29, 0
      %p223 = por %p221, %p222
      %p224 = scmp.ne.s32.totalorder %s212, %s213
      %p225 = scmp.eq.s32.totalorder %s30, 1
      %p226 = por %p224, %p225
      %p228 = scmp.ne.s32.totalorder %s213, %s227
      %p229 = scmp.eq.s32.totalorder %s30, 0
      %p230 = por %p228, %p229
      %s232 = sadd.s32 %s231, 1
      %p235 = scmp.eq.s32.totalorder %s24, 1
      %p236 = scmp.ne.s32.totalorder %s231, %s233
      %p237 = scmp.eq.s32.totalorder %s24, 0
      %p238 = por %p236, %p237
      %p239 = scmp.ne.s32.totalorder %s231, %s233
      %p240 = scmp.eq.s32.totalorder %s29, 1
      %p241 = por %p239, %p240
      %p242 = scmp.ne.s32.totalorder %s233, %s234
      %p243 = scmp.eq.s32.totalorder %s29, 0
      %p244 = por %p242, %p243
      %p245 = scmp.ne.s32.totalorder %s233, %s234
      %p246 = scmp.eq.s32.totalorder %s30, 1
      %p247 = por %p245, %p246
      %p249 = scmp.ne.s32.totalorder %s234, %s248
      %p250 = scmp.eq.s32.totalorder %s30, 0
      %p251 = por %p249, %p250
      %s253 = sadd.s32 %s252, 1
      %p256 = scmp.eq.s32.totalorder %s24, 1
      %p257 = scmp.ne.s32.totalorder %s252, %s254
      %p258 = scmp.eq.s32.totalorder %s24, 0
      %p259 = por %p257, %p258
      %p260 = scmp.ne.s32.totalorder %s252, %s254
      %p261 = scmp.eq.s32.totalorder %s29, 1
      %p262 = por %p260, %p261
      %p263 = scmp.ne.s32.totalorder %s254, %s255
      %p264 = scmp.eq.s32.totalorder %s29, 0
      %p265 = por %p263, %p264
      %p266 = scmp.ne.s32.totalorder %s254, %s255
      %p267 = scmp.eq.s32.totalorder %s30, 1
      %p268 = por %p266, %p267
      %p270 = scmp.ne.s32.totalorder %s255, %s269
      %p271 = scmp.eq.s32.totalorder %s30, 0
      %p272 = por %p270, %p271
      %s274 = sadd.s32 %s273, 1
      %p277 = scmp.eq.s32.totalorder %s24, 1
      %p278 = scmp.ne.s32.totalorder %s273, %s275
      %p279 = scmp.eq.s32.totalorder %s24, 0
      %p280 = por %p278, %p279
      %p281 = scmp.ne.s32.totalorder %s273, %s275
      %p282 = scmp.eq.s32.totalorder %s29, 1
      %p283 = por %p281, %p282
      %p284 = scmp.ne.s32.totalorder %s275, %s276
      %p285 = scmp.eq.s32.totalorder %s29, 0
      %p286 = por %p284, %p285
      %p287 = scmp.ne.s32.totalorder %s275, %s276
      %p288 = scmp.eq.s32.totalorder %s30, 1
      %p289 = por %p287, %p288
      %p291 = scmp.ne.s32.totalorder %s276, %s290
      %p292 = scmp.eq.s32.totalorder %s30, 0
      %p293 = por %p291, %p292
      %s294 = ssub.s32 %s24, %s31
      %p295 = scmp.eq.s32.totalorder %s294, 0
      %s297 = sadd.s32 %s296, 1
      %s298 = scalar_select %p295, %s296, %s297
      %p301 = pneg %p295
      %p302 = scmp.eq.s32.totalorder %s24, 1
      %p303 = por %p301, %p302
      %p304 = scmp.ne.s32.totalorder %s296, %s299
      %p305 = scmp.eq.s32.totalorder %s24, 0
      %p306 = por %p304, %p305
      %p307 = scmp.ne.s32.totalorder %s296, %s299
      %p308 = scmp.eq.s32.totalorder %s29, 1
      %p309 = por %p307, %p308
      %p310 = scmp.ne.s32.totalorder %s299, %s300
      %p311 = scmp.eq.s32.totalorder %s29, 0
      %p312 = por %p310, %p311
      %p313 = scmp.ne.s32.totalorder %s299, %s300
      %p314 = scmp.eq.s32.totalorder %s30, 1
      %p315 = por %p313, %p314
      %p317 = scmp.ne.s32.totalorder %s300, %s316
      %p318 = scmp.eq.s32.totalorder %s30, 0
      %p319 = por %p317, %p318
      %p320 = scmp.le.s32.totalorder 1, %s24
      %p321 = scmp.lt.s32.totalorder %s24, 3
      %p322 = pnand %p320, %p321
      %p323 = pneg %p322
      // Predicated region
      $region9: #{tpu_custom_call.1} parent=5 // pred_check
        _
      $region10: #{tpu_custom_call.1} parent=5 // pred_check_branch
        %325 = sbr.rel (%p322) target = $region12
      $region11: #{tpu_custom_call.1} parent=5 // pred_region
        %s326 = ssub.s32 %s24, 1
        // Predicated region
        $region13: #{tpu_custom_call.1} parent=11 // pred_check
          %p327 = pneg %p97
        $region14: #{tpu_custom_call.1} parent=11 // pred_check_branch
          %329 = sbr.rel (%p327) target = $region16
        $region15: #{tpu_custom_call.1} parent=11 // pred_region
          _
        $region16: #{tpu_custom_call.1} parent=11 // pred_fallthru
          _
        // Predicated region
        $region17: #{tpu_custom_call.1} parent=11 // pred_check
          %p330 = pneg %p118
        $region18: #{tpu_custom_call.1} parent=11 // pred_check_branch
          %332 = sbr.rel (%p330) target = $region20
        $region19: #{tpu_custom_call.1} parent=11 // pred_region
          _
        $region20: #{tpu_custom_call.1} parent=11 // pred_fallthru
          _
        // Predicated region
        $region21: #{tpu_custom_call.1} parent=11 // pred_check
          %p333 = pneg %p139
        $region22: #{tpu_custom_call.1} parent=11 // pred_check_branch
          %335 = sbr.rel (%p333) target = $region24
        $region23: #{tpu_custom_call.1} parent=11 // pred_region
          _
        $region24: #{tpu_custom_call.1} parent=11 // pred_fallthru
          _
        // Predicated region
        $region25: #{tpu_custom_call.1} parent=11 // pred_check
          %p336 = pneg %p160
        $region26: #{tpu_custom_call.1} parent=11 // pred_check_branch
          %338 = sbr.rel (%p336) target = $region28
        $region27: #{tpu_custom_call.1} parent=11 // pred_region
          _
        $region28: #{tpu_custom_call.1} parent=11 // pred_fallthru
          _
        // Predicated region
        $region29: #{tpu_custom_call.1} parent=11 // pred_check
          %p339 = pneg %p181
        $region30: #{tpu_custom_call.1} parent=11 // pred_check_branch
          %341 = sbr.rel (%p339) target = $region32
        $region31: #{tpu_custom_call.1} parent=11 // pred_region
          %s343 = ssub.s32 512, 512
          %344 = vsyncadd [#allocation11], %s343
          %s345 = sshll.u32 [#allocation10], 4
          %s346 = int_to_ptr.vmem [resolvable:$true] %s345
          %351 = dma.hbm_to_vmem [thread:$0]  %s6, 512, %s346, [#allocation11], 64, 64, 4
        $region32: #{tpu_custom_call.1} parent=11 // pred_fallthru
          _
        // Predicated region
        $region33: #{tpu_custom_call.1} parent=11 // pred_check
          %p352 = pneg %p202
        $region34: #{tpu_custom_call.1} parent=11 // pred_check_branch
          %354 = sbr.rel (%p352) target = $region36
        $region35: #{tpu_custom_call.1} parent=11 // pred_region
          _
        $region36: #{tpu_custom_call.1} parent=11 // pred_fallthru
          _
        // Predicated region
        $region37: #{tpu_custom_call.1} parent=11 // pred_check
          %p355 = pneg %p223
        $region38: #{tpu_custom_call.1} parent=11 // pred_check_branch
          %357 = sbr.rel (%p355) target = $region40
        $region39: #{tpu_custom_call.1} parent=11 // pred_region
          _
        $region40: #{tpu_custom_call.1} parent=11 // pred_fallthru
          _
        // Predicated region
        $region41: #{tpu_custom_call.1} parent=11 // pred_check
          %p358 = pneg %p244
        $region42: #{tpu_custom_call.1} parent=11 // pred_check_branch
          %360 = sbr.rel (%p358) target = $region44
        $region43: #{tpu_custom_call.1} parent=11 // pred_region
          _
        $region44: #{tpu_custom_call.1} parent=11 // pred_fallthru
          _
        // Predicated region
        $region45: #{tpu_custom_call.1} parent=11 // pred_check
          %p361 = pneg %p265
        $region46: #{tpu_custom_call.1} parent=11 // pred_check_branch
          %363 = sbr.rel (%p361) target = $region48
        $region47: #{tpu_custom_call.1} parent=11 // pred_region
          _
        $region48: #{tpu_custom_call.1} parent=11 // pred_fallthru
          _
        // Predicated region
        $region49: #{tpu_custom_call.1} parent=11 // pred_check
          %p364 = pneg %p286
        $region50: #{tpu_custom_call.1} parent=11 // pred_check_branch
          %366 = sbr.rel (%p364) target = $region52
        $region51: #{tpu_custom_call.1} parent=11 // pred_region
          _
        $region52: #{tpu_custom_call.1} parent=11 // pred_fallthru
          _
      $region12: #{tpu_custom_call.1} parent=5 // pred_fallthru
        _
      %p367 = scmp.lt.s32.totalorder %s24, 2
      // Predicated region
      $region53: #{tpu_custom_call.1} parent=5 // pred_check
        %p368 = pneg %p367
      $region54: #{tpu_custom_call.1} parent=5 // pred_check_branch
        %370 = sbr.rel (%p368) target = $region56
      $region55: #{tpu_custom_call.1} parent=5 // pred_region
        // Predicated region
        $region57: #{tpu_custom_call.1} parent=55 // pred_check
          %p371 = pneg %p44
        $region58: #{tpu_custom_call.1} parent=55 // pred_check_branch
          %373 = sbr.rel (%p371) target = $region60
        $region59: #{tpu_custom_call.1} parent=55 // pred_region
          %p374 = scmp.lt.s32.totalorder %s24, 1
          %s375 = scalar_select %p374, %s24, 1
          %s376 = smul.addr %s375, 8
          %s377 = scalar_lea.vmem %s0, %s376
        $region60: #{tpu_custom_call.1} parent=55 // pred_fallthru
          _
        // Predicated region
        $region61: #{tpu_custom_call.1} parent=55 // pred_check
          %p378 = pneg %p70
        $region62: #{tpu_custom_call.1} parent=55 // pred_check_branch
          %380 = sbr.rel (%p378) target = $region64
        $region63: #{tpu_custom_call.1} parent=55 // pred_region
          %s381 = sand.u32 %s60, 1
          %s382 = scalar_lea.sflag [#allocation9], %s381
          %s383 = sand.u32 %s60, 1
          %s384 = smul.addr %s383, 8
          %s385 = scalar_lea.vmem [#allocation8], %s384
          %s387 = ssub.s32 128, 128
          %388 = vsyncadd %s382, %s387
          %s389 = smul.addr %s24, 128
          %s390 = scalar_lea.hbm %s1, %s389
          %s392 = sshll.u32 %s385, 4
          %s393 = int_to_ptr.vmem [resolvable:$true] %s392
          %395 = dma.hbm_to_vmem [thread:$0]  %s390, 128, %s393, %s382
        $region64: #{tpu_custom_call.1} parent=55 // pred_fallthru
          _
      $region56: #{tpu_custom_call.1} parent=5 // pred_fallthru
        _
      %p396 = scmp.le.s32.totalorder 1, %s24
      %p397 = scmp.lt.s32.totalorder %s24, 3
      %p398 = pnand %p396, %p397
      %p399 = pneg %p398
      // Predicated region
      $region65: #{tpu_custom_call.1} parent=5 // pred_check
        _
      $region66: #{tpu_custom_call.1} parent=5 // pred_check_branch
        %401 = sbr.rel (%p398) target = $region68
      $region67: #{tpu_custom_call.1} parent=5 // pred_region
        %s402 = ssub.s32 %s24, 1
        %s403 = sand.u32 %s63, 1
        %s404 = scalar_lea.sflag [#allocation9], %s403
        %s405 = sand.u32 %s63, 1
        %s406 = smul.addr %s405, 8
        %s407 = scalar_lea.vmem [#allocation8], %s406
        // Predicated region
        $region69: #{tpu_custom_call.1} parent=67 // pred_check
          %p408 = pneg %p76
        $region70: #{tpu_custom_call.1} parent=67 // pred_check_branch
          %410 = sbr.rel (%p408) target = $region72
        $region71: #{tpu_custom_call.1} parent=67 // pred_region
          %411 = dma.done %s404, 128
        $region72: #{tpu_custom_call.1} parent=67 // pred_fallthru
          _
        // Predicated region
        $region73: #{tpu_custom_call.1} parent=67 // pred_check
          %p412 = pneg %p181
        $region74: #{tpu_custom_call.1} parent=67 // pred_check_branch
          %414 = sbr.rel (%p412) target = $region76
        $region75: #{tpu_custom_call.1} parent=67 // pred_region
          %415 = dma.done [#allocation11], 512
        $region76: #{tpu_custom_call.1} parent=67 // pred_fallthru
          _
        %p416 = scmp.lt.s32.totalorder %s29, 1
        %s417 = scalar_select %p416, %s29, 1
        %s418 = smul.addr %s417, 8
        %s419 = scalar_lea.vmem %s0, %s418
        %p420 = pneg %p50
        %p421 = pneg %p47
        %s422 = sand.u32 %s63, 1
        %s423 = scalar_lea.sflag [#allocation9], %s422
        %s424 = sand.u32 %s63, 1
        %s425 = smul.addr %s424, 8
        %s426 = scalar_lea.vmem [#allocation8], %s425
        %p427 = pneg %p76
        %p428 = pneg %p73
        %p429 = pneg %p97
        %p430 = pneg %p94
        %p431 = pneg %p118
        %p432 = pneg %p115
        %p433 = pneg %p139
        %p434 = pneg %p136
        %p435 = pneg %p160
        %p436 = pneg %p157
        %p437 = pneg %p181
        %p438 = pneg %p178
        %p439 = pneg %p202
        %p440 = pneg %p199
        %p441 = pneg %p223
        %p442 = pneg %p220
        %p443 = pneg %p244
        %p444 = pneg %p241
        %p445 = pneg %p265
        %p446 = pneg %p262
        %p447 = pneg %p286
        %p448 = pneg %p283
        %p449 = pneg %p312
        %p450 = pneg %p309
        %p451 = scmp.lt.s32.totalorder %s29, 1
        %s452 = scalar_select %p451, %s29, 1
        %s453 = smul.addr %s452, 8
        %s454 = scalar_lea.vmem %s12, %s453
        %p455 = scmp.lt.s32.totalorder %s29, 1
        %s456 = scalar_select %p455, %s29, 1
        %s457 = smul.addr %s456, 8
        %s458 = scalar_lea.vmem %s0, %s457
        %p459 = scmp.lt.s32.totalorder %s29, 1
        %s460 = scalar_select %p459, %s29, 1
        %s461 = smul.addr %s460, 8
        %s462 = scalar_lea.vmem %s12, %s461
        %v464 = vld [vmem:[%s458] sm:$0xff]
        %v465 = vpack.c.bf16 %v464, %v464
        %v466 = vld [vmem:[%s4] sm:$0xff]
        %v467 = vld [vmem:[%s4 + $0x8] sm:$0xff]
        %v468 = vld [vmem:[%s4 + $0x10] sm:$0xff]
        %v469 = vld [vmem:[%s4 + $0x18] sm:$0xff]
        %v470 = vld [vmem:[%s4 + $0x20] sm:$0xff]
        %v471 = vld [vmem:[%s4 + $0x28] sm:$0xff]
        %v472 = vld [vmem:[%s4 + $0x30] sm:$0xff]
        %v473 = vld [vmem:[%s4 + $0x38] sm:$0xff]
        %v474 = vld [vmem:[%s5] sm:$0x3]
        %v476 = vlaneseq
        %v477 = vshrl.u32 %v476, 7
        %v478 = vsub.s32 0, %v477
        %v479 = vrot.slane %v474, %v478
        %v480 = vlaneseq
        %v481 = vshrl.u32 %v480, 7
        %v482 = vsub.s32 1, %v481
        %v483 = vrot.slane %v474, %v482
        %v494 = vunpack.c.l.b16 %v466
        %v495 = vunpack.c.h.b16 %v466
        %v496 = vunpack.c.l.b16 %v467
        %v497 = vunpack.c.h.b16 %v467
        %v498 = vunpack.c.l.b16 %v468
        %v499 = vunpack.c.h.b16 %v468
        %v500 = vunpack.c.l.b16 %v469
        %v501 = vunpack.c.h.b16 %v469
        %v502 = vunpack.c.l.b16 %v470
        %v503 = vunpack.c.h.b16 %v470
        %v504 = vunpack.c.l.b16 %v471
        %v505 = vunpack.c.h.b16 %v471
        %v506 = vunpack.c.l.b16 %v472
        %v507 = vunpack.c.h.b16 %v472
        %v508 = vunpack.c.l.b16 %v473
        %v509 = vunpack.c.h.b16 %v473
        %v510 = vpack.c.b16 %v496, %v494
        %v511 = vpack.c.b16 %v497, %v495
        %v512 = vpack.c.b16 %v500, %v498
        %v513 = vpack.c.b16 %v501, %v499
        %v514 = vpack.c.b16 %v504, %v502
        %v515 = vpack.c.b16 %v505, %v503
        %v516 = vpack.c.b16 %v508, %v506
        %v517 = vpack.c.b16 %v509, %v507
        %vm526 = vcmask 523264
        %v528 = vsel %vm526, %v465, 0
        %530 = vmatprep.subr.bf16.mxu0 %v511
        %531 = vmatpush1.bf16.msra.mxu0 %v510
        %532 = vmatprep.subr.bf16.mxu0 %v513
        %533 = vmatpush1.bf16.msra.mxu0 %v512
        %534 = vmatprep.subr.bf16.mxu0 %v515
        %535 = vmatpush1.bf16.msra.mxu0 %v514
        %536 = vmatprep.subr.bf16.mxu0 %v517
        %537 = vmatpush1.bf16.msra.mxu0 %v516
        %538 = vmatprep.subr.bf16.mxu0 0
        %539 = vmatpush1.bf16.msra.mxu0 0
        %540 = vmatprep.subr.bf16.mxu0 0
        %541 = vmatpush1.bf16.msra.mxu0 0
        %542 = vmatprep.subr.bf16.mxu0 0
        %543 = vmatpush1.bf16.msra.mxu0 0
        %544 = vmatprep.subr.bf16.mxu0 0
        %545 = vmatpush1.bf16.msra.mxu0 0
        %546 = vmatprep.subr.bf16.mxu0 0
        %547 = vmatpush1.bf16.msra.mxu0 0
        %548 = vmatprep.subr.bf16.mxu0 0
        %549 = vmatpush1.bf16.msra.mxu0 0
        %550 = vmatprep.subr.bf16.mxu0 0
        %551 = vmatpush1.bf16.msra.mxu0 0
        %552 = vmatprep.subr.bf16.mxu0 0
        %553 = vmatpush1.bf16.msra.mxu0 0
        %554 = vmatprep.subr.bf16.mxu0 0
        %555 = vmatpush1.bf16.msra.mxu0 0
        %556 = vmatprep.subr.bf16.mxu0 0
        %557 = vmatpush1.bf16.msra.mxu0 0
        %558 = vmatprep.subr.bf16.mxu0 0
        %559 = vmatpush1.bf16.msra.mxu0 0
        %560 = vmatprep.subr.bf16.mxu0 0
        %561 = vmatpush1.bf16.msra.mxu0 0
        %562 = vmatprep.mubr.bf16.mxu0 0
        %563 = vmatmul.mubr.bf16.gmra.mrb[0].mxu0 %v528
        %v564 = vpop.f32.mrb[0].mxu0
        %v565 = vadd.f32 %v479, %v564
        %v566 = vpop.f32.mrb[0].mxu0
        %v567 = vadd.f32 %v483, %v566
        %v568 = vpop.f32.mrb[0].mxu0
        %v569 = vpop.f32.mrb[0].mxu0
        %570 = vdwg.mxu0
        %v571 = vpack.c.bf16 %v565, %v565
        %vm572 = vcmask 519168
        %573 = vst.msk [vmem:[#allocation2] sm:$0xf] %vm572, %v571
        %v574 = vpack.c.bf16 %v567, %v567
        %575 = vst.msk [vmem:[#allocation4] sm:$0xf] %vm572, %v574
        %577 = vrot.lane.b32.xlu0 %v565, 64
        %v578 = vpop.permute.xlu0 %577
        %580 = vxpose.xlu0.b32.start [1/16] %v578, 128
        %581 = vxpose.xlu0.b32.cont [2/16] 0.0, 128
        %582 = vxpose.xlu0.b32.cont [3/16] 0.0, 128
        %583 = vxpose.xlu0.b32.cont [4/16] 0.0, 128
        %584 = vxpose.xlu0.b32.cont [5/16] 0.0, 128
        %585 = vxpose.xlu0.b32.cont [6/16] 0.0, 128
        %586 = vxpose.xlu0.b32.cont [7/16] 0.0, 128
        %587 = vxpose.xlu0.b32.cont [8/16] 0.0, 128
        %588 = vxpose.xlu0.b32.cont [9/16] 0.0, 128
        %589 = vxpose.xlu0.b32.cont [10/16] 0.0, 128
        %590 = vxpose.xlu0.b32.cont [11/16] 0.0, 128
        %591 = vxpose.xlu0.b32.cont [12/16] 0.0, 128
        %592 = vxpose.xlu0.b32.cont [13/16] 0.0, 128
        %593 = vxpose.xlu0.b32.cont [14/16] 0.0, 128
        %594 = vxpose.xlu0.b32.cont [15/16] 0.0, 128
        %595 = vxpose.xlu0.b32.end [16/16] 0.0, 128
        %v596 = vpop.trf.xlu0
        %v597 = vpop.trf.xlu0
        %v598 = vpop.trf.xlu0
        %v599 = vpop.trf.xlu0
        %v600 = vpop.trf.xlu0
        %v601 = vpop.trf.xlu0
        %v602 = vpop.trf.xlu0
        %v603 = vpop.trf.xlu0
        %v604 = vpop.trf.xlu0
        %v605 = vpop.trf.xlu0
        %v606 = vpop.trf.xlu0
        %v607 = vpop.trf.xlu0
        %v608 = vpop.trf.xlu0
        %v609 = vpop.trf.xlu0
        %v610 = vpop.trf.xlu0
        %v611 = vpop.trf.xlu0
        %v612 = vpack.c.bf16 %v597, %v596
        %v613 = vpack.c.bf16 %v599, %v598
        %v614 = vpack.c.bf16 %v601, %v600
        %v615 = vpack.c.bf16 %v603, %v602
        %vm616 = vcmask 64512
        %617 = vst.msk [vmem:[#allocation3] sm:$0xff] %vm616, %v612
        %618 = vst.msk [vmem:[#allocation3 + $0x8] sm:$0xff] %vm616, %v613
        %619 = vst.msk [vmem:[#allocation3 + $0x10] sm:$0xff] %vm616, %v614
        %620 = vst.msk [vmem:[#allocation3 + $0x18] sm:$0xff] %vm616, %v615
        %v621 = vld [vmem:[#allocation2] sm:$0xf]
        %v622 = vld [vmem:[#allocation4] sm:$0xf]
        %v623 = vld [vmem:[#allocation3] sm:$0xff]
        %v624 = vld [vmem:[#allocation3 + $0x8] sm:$0xff]
        %v625 = vld [vmem:[#allocation3 + $0x10] sm:$0xff]
        %v626 = vld [vmem:[#allocation3 + $0x18] sm:$0xff]
        %v627 = vld [vmem:[%s2] sm:$0xf]
        %v628 = vld [vmem:[%s2 + $0x4] sm:$0xf]
        %v629 = vld [vmem:[%s2 + $0x8] sm:$0xf]
        %v630 = vld [vmem:[%s2 + $0xc] sm:$0xf]
        %v631 = vld [vmem:[%s2 + $0x10] sm:$0xf]
        %v632 = vld [vmem:[%s2 + $0x14] sm:$0xf]
        %v633 = vld [vmem:[%s2 + $0x18] sm:$0xf]
        %v634 = vld [vmem:[%s2 + $0x1c] sm:$0xf]
        %v635 = vld [vmem:[%s3] sm:$0xf]
        %v636 = vld [vmem:[%s3 + $0x4] sm:$0xf]
        %v637 = vld [vmem:[%s3 + $0x8] sm:$0xf]
        %v638 = vld [vmem:[%s3 + $0xc] sm:$0xf]
        %v639 = vld [vmem:[%s3 + $0x10] sm:$0xf]
        %v640 = vld [vmem:[%s3 + $0x14] sm:$0xf]
        %v641 = vld [vmem:[%s3 + $0x18] sm:$0xf]
        %v642 = vld [vmem:[%s3 + $0x1c] sm:$0xf]
        %v643 = vld [vmem:[%s3 + $0x20] sm:$0xf]
        %v644 = vld [vmem:[%s3 + $0x24] sm:$0xf]
        %v645 = vld [vmem:[%s3 + $0x28] sm:$0xf]
        %v646 = vld [vmem:[%s3 + $0x2c] sm:$0xf]
        %v647 = vld [vmem:[%s3 + $0x30] sm:$0xf]
        %v648 = vld [vmem:[%s3 + $0x34] sm:$0xf]
        %v649 = vld [vmem:[%s3 + $0x38] sm:$0xf]
        %v650 = vld [vmem:[%s3 + $0x3c] sm:$0xf]
        %655 = vrot.lane.b32.xlu0 %v623, 8
        %v656 = vpop.permute.xlu0 %655
        %657 = vrot.lane.b32.xlu0 %v624, 8
        %v658 = vpop.permute.xlu0 %657
        %659 = vrot.lane.b32.xlu0 %v625, 8
        %v660 = vpop.permute.xlu0 %659
        %661 = vrot.lane.b32.xlu0 %v626, 8
        %v662 = vpop.permute.xlu0 %661
        %663 = vrot.lane.b32.xlu0 %v623, 16
        %v664 = vpop.permute.xlu0 %663
        %665 = vrot.lane.b32.xlu0 %v624, 16
        %v666 = vpop.permute.xlu0 %665
        %667 = vrot.lane.b32.xlu0 %v625, 16
        %v668 = vpop.permute.xlu0 %667
        %669 = vrot.lane.b32.xlu0 %v626, 16
        %v670 = vpop.permute.xlu0 %669
        %671 = vrot.lane.b32.xlu0 %v623, 24
        %v672 = vpop.permute.xlu0 %671
        %673 = vrot.lane.b32.xlu0 %v624, 24
        %v674 = vpop.permute.xlu0 %673
        %675 = vrot.lane.b32.xlu0 %v625, 24
        %v676 = vpop.permute.xlu0 %675
        %677 = vrot.lane.b32.xlu0 %v626, 24
        %v678 = vpop.permute.xlu0 %677
        %679 = vrot.lane.b32.xlu0 %v623, 32
        %v680 = vpop.permute.xlu0 %679
        %681 = vrot.lane.b32.xlu0 %v624, 32
        %v682 = vpop.permute.xlu0 %681
        %683 = vrot.lane.b32.xlu0 %v625, 32
        %v684 = vpop.permute.xlu0 %683
        %685 = vrot.lane.b32.xlu0 %v626, 32
        %v686 = vpop.permute.xlu0 %685
        %687 = vrot.lane.b32.xlu0 %v623, 40
        %v688 = vpop.permute.xlu0 %687
        %689 = vrot.lane.b32.xlu0 %v624, 40
        %v690 = vpop.permute.xlu0 %689
        %691 = vrot.lane.b32.xlu0 %v625, 40
        %v692 = vpop.permute.xlu0 %691
        %693 = vrot.lane.b32.xlu0 %v626, 40
        %v694 = vpop.permute.xlu0 %693
        %695 = vrot.lane.b32.xlu0 %v623, 48
        %v696 = vpop.permute.xlu0 %695
        %697 = vrot.lane.b32.xlu0 %v624, 48
        %v698 = vpop.permute.xlu0 %697
        %699 = vrot.lane.b32.xlu0 %v625, 48
        %v700 = vpop.permute.xlu0 %699
        %701 = vrot.lane.b32.xlu0 %v626, 48
        %v702 = vpop.permute.xlu0 %701
        %703 = vrot.lane.b32.xlu0 %v623, 56
        %v704 = vpop.permute.xlu0 %703
        %705 = vrot.lane.b32.xlu0 %v624, 56
        %v706 = vpop.permute.xlu0 %705
        %707 = vrot.lane.b32.xlu0 %v625, 56
        %v708 = vpop.permute.xlu0 %707
        %709 = vrot.lane.b32.xlu0 %v626, 56
        %v710 = vpop.permute.xlu0 %709
        %711 = vrot.lane.b32.xlu0 %v623, 64
        %v712 = vpop.permute.xlu0 %711
        %713 = vrot.lane.b32.xlu0 %v624, 64
        %v714 = vpop.permute.xlu0 %713
        %715 = vrot.lane.b32.xlu0 %v625, 64
        %v716 = vpop.permute.xlu0 %715
        %717 = vrot.lane.b32.xlu0 %v626, 64
        %v718 = vpop.permute.xlu0 %717
        %719 = vrot.lane.b32.xlu0 %v623, 72
        %v720 = vpop.permute.xlu0 %719
        %721 = vrot.lane.b32.xlu0 %v624, 72
        %v722 = vpop.permute.xlu0 %721
        %723 = vrot.lane.b32.xlu0 %v625, 72
        %v724 = vpop.permute.xlu0 %723
        %725 = vrot.lane.b32.xlu0 %v626, 72
        %v726 = vpop.permute.xlu0 %725
        %727 = vrot.lane.b32.xlu0 %v623, 80
        %v728 = vpop.permute.xlu0 %727
        %729 = vrot.lane.b32.xlu0 %v624, 80
        %v730 = vpop.permute.xlu0 %729
        %731 = vrot.lane.b32.xlu0 %v625, 80
        %v732 = vpop.permute.xlu0 %731
        %733 = vrot.lane.b32.xlu0 %v626, 80
        %v734 = vpop.permute.xlu0 %733
        %735 = vrot.lane.b32.xlu0 %v623, 88
        %v736 = vpop.permute.xlu0 %735
        %737 = vrot.lane.b32.xlu0 %v624, 88
        %v738 = vpop.permute.xlu0 %737
        %739 = vrot.lane.b32.xlu0 %v625, 88
        %v740 = vpop.permute.xlu0 %739
        %741 = vrot.lane.b32.xlu0 %v626, 88
        %v742 = vpop.permute.xlu0 %741
        %743 = vrot.lane.b32.xlu0 %v623, 96
        %v744 = vpop.permute.xlu0 %743
        %745 = vrot.lane.b32.xlu0 %v624, 96
        %v746 = vpop.permute.xlu0 %745
        %747 = vrot.lane.b32.xlu0 %v625, 96
        %v748 = vpop.permute.xlu0 %747
        %749 = vrot.lane.b32.xlu0 %v626, 96
        %v750 = vpop.permute.xlu0 %749
        %751 = vrot.lane.b32.xlu0 %v623, 104
        %v752 = vpop.permute.xlu0 %751
        %753 = vrot.lane.b32.xlu0 %v624, 104
        %v754 = vpop.permute.xlu0 %753
        %755 = vrot.lane.b32.xlu0 %v625, 104
        %v756 = vpop.permute.xlu0 %755
        %757 = vrot.lane.b32.xlu0 %v626, 104
        %v758 = vpop.permute.xlu0 %757
        %759 = vrot.lane.b32.xlu0 %v623, 112
        %v760 = vpop.permute.xlu0 %759
        %761 = vrot.lane.b32.xlu0 %v624, 112
        %v762 = vpop.permute.xlu0 %761
        %763 = vrot.lane.b32.xlu0 %v625, 112
        %v764 = vpop.permute.xlu0 %763
        %765 = vrot.lane.b32.xlu0 %v626, 112
        %v766 = vpop.permute.xlu0 %765
        %767 = vrot.lane.b32.xlu0 %v623, 120
        %v768 = vpop.permute.xlu0 %767
        %769 = vrot.lane.b32.xlu0 %v624, 120
        %v770 = vpop.permute.xlu0 %769
        %771 = vrot.lane.b32.xlu0 %v625, 120
        %v772 = vpop.permute.xlu0 %771
        %773 = vrot.lane.b32.xlu0 %v626, 120
        %v774 = vpop.permute.xlu0 %773
        %v777 = vsel %vm616, %v623, %v656
        %v780 = vsel %vm616, %v624, %v658
        %v783 = vsel %vm616, %v625, %v660
        %v786 = vsel %vm616, %v626, %v662
        %vm787 = vcmask 130048
        %v789 = vsel %vm787, %v777, %v664
        %v791 = vsel %vm787, %v780, %v666
        %v793 = vsel %vm787, %v783, %v668
        %v795 = vsel %vm787, %v786, %v670
        %vm796 = vcmask 195584
        %v798 = vsel %vm796, %v789, %v672
        %v800 = vsel %vm796, %v791, %v674
        %v802 = vsel %vm796, %v793, %v676
        %v804 = vsel %vm796, %v795, %v678
        %vm805 = vcmask 261120
        %v807 = vsel %vm805, %v798, %v680
        %v809 = vsel %vm805, %v800, %v682
        %v811 = vsel %vm805, %v802, %v684
        %v813 = vsel %vm805, %v804, %v686
        %vm814 = vcmask 326656
        %v816 = vsel %vm814, %v807, %v688
        %v818 = vsel %vm814, %v809, %v690
        %v820 = vsel %vm814, %v811, %v692
        %v822 = vsel %vm814, %v813, %v694
        %vm823 = vcmask 392192
        %v825 = vsel %vm823, %v816, %v696
        %v827 = vsel %vm823, %v818, %v698
        %v829 = vsel %vm823, %v820, %v700
        %v831 = vsel %vm823, %v822, %v702
        %vm832 = vcmask 457728
        %v834 = vsel %vm832, %v825, %v704
        %v836 = vsel %vm832, %v827, %v706
        %v838 = vsel %vm832, %v829, %v708
        %v840 = vsel %vm832, %v831, %v710
        %v842 = vsel %vm526, %v834, %v712
        %v844 = vsel %vm526, %v836, %v714
        %v846 = vsel %vm526, %v838, %v716
        %v848 = vsel %vm526, %v840, %v718
        %vm849 = vcmask 588800
        %v851 = vsel %vm849, %v842, %v720
        %v853 = vsel %vm849, %v844, %v722
        %v855 = vsel %vm849, %v846, %v724
        %v857 = vsel %vm849, %v848, %v726
        %vm858 = vcmask 654336
        %v860 = vsel %vm858, %v851, %v728
        %v862 = vsel %vm858, %v853, %v730
        %v864 = vsel %vm858, %v855, %v732
        %v866 = vsel %vm858, %v857, %v734
        %vm867 = vcmask 719872
        %v869 = vsel %vm867, %v860, %v736
        %v871 = vsel %vm867, %v862, %v738
        %v873 = vsel %vm867, %v864, %v740
        %v875 = vsel %vm867, %v866, %v742
        %vm876 = vcmask 785408
        %v878 = vsel %vm876, %v869, %v744
        %v880 = vsel %vm876, %v871, %v746
        %v882 = vsel %vm876, %v873, %v748
        %v884 = vsel %vm876, %v875, %v750
        %vm885 = vcmask 850944
        %v887 = vsel %vm885, %v878, %v752
        %v889 = vsel %vm885, %v880, %v754
        %v891 = vsel %vm885, %v882, %v756
        %v893 = vsel %vm885, %v884, %v758
        %vm894 = vcmask 916480
        %v896 = vsel %vm894, %v887, %v760
        %v898 = vsel %vm894, %v889, %v762
        %v900 = vsel %vm894, %v891, %v764
        %v902 = vsel %vm894, %v893, %v766
        %vm903 = vcmask 982016
        %v905 = vsel %vm903, %v896, %v768
        %v908 = vsel %vm903, %v898, %v770
        %v911 = vsel %vm903, %v900, %v772
        %v914 = vsel %vm903, %v902, %v774
        %v924 = vunpack.c.l.b16 %v627
        %v925 = vunpack.c.l.b16 %v628
        %v926 = vunpack.c.l.b16 %v629
        %v927 = vunpack.c.l.b16 %v630
        %v928 = vunpack.c.l.b16 %v631
        %v929 = vunpack.c.l.b16 %v632
        %v930 = vunpack.c.l.b16 %v633
        %v931 = vunpack.c.l.b16 %v634
        %v932 = vpack.c.b16 %v925, %v924
        %v933 = vpack.c.b16 %v927, %v926
        %v934 = vpack.c.b16 %v929, %v928
        %v935 = vpack.c.b16 %v931, %v930
        %v940 = vmul.bf16 %v905, %v932
        %v941 = vmul.bf16 %v908, %v933
        %v942 = vmul.bf16 %v911, %v934
        %v943 = vmul.bf16 %v914, %v935
        %v945 = vunpack.c.l.b16 %v622
        %v946 = vpack.c.b16 %v945, %v945
        %vm947 = vcmask 1043456
        %v950 = vsel %vm947, %v622, %v946
        %v968 = vunpack.c.l.b16 %v635
        %v969 = vunpack.c.l.b16 %v636
        %v970 = vunpack.c.l.b16 %v637
        %v971 = vunpack.c.l.b16 %v638
        %v972 = vunpack.c.l.b16 %v639
        %v973 = vunpack.c.l.b16 %v640
        %v974 = vunpack.c.l.b16 %v641
        %v975 = vunpack.c.l.b16 %v642
        %v976 = vunpack.c.l.b16 %v643
        %v977 = vunpack.c.l.b16 %v644
        %v978 = vunpack.c.l.b16 %v645
        %v979 = vunpack.c.l.b16 %v646
        %v980 = vunpack.c.l.b16 %v647
        %v981 = vunpack.c.l.b16 %v648
        %v982 = vunpack.c.l.b16 %v649
        %v983 = vunpack.c.l.b16 %v650
        %v984 = vpack.c.b16 %v969, %v968
        %v985 = vpack.c.b16 %v971, %v970
        %v986 = vpack.c.b16 %v973, %v972
        %v987 = vpack.c.b16 %v975, %v974
        %v988 = vpack.c.b16 %v977, %v976
        %v989 = vpack.c.b16 %v979, %v978
        %v990 = vpack.c.b16 %v981, %v980
        %v991 = vpack.c.b16 %v983, %v982
        %v1000 = vmul.bf16 %v950, %v984
        %v1001 = vmul.bf16 %v950, %v985
        %v1002 = vmul.bf16 %v950, %v986
        %v1003 = vmul.bf16 %v950, %v987
        %v1004 = vmul.bf16 %v950, %v988
        %v1005 = vmul.bf16 %v950, %v989
        %v1006 = vmul.bf16 %v950, %v990
        %v1007 = vmul.bf16 %v950, %v991
        %v1008 = vld [vmem:[%s407] sm:$0xff]
        %v1010 = vsel %vm526, %v621, 0
        %1012 = vmatprep.subr.bf16.mxu0 0
        %1013 = vmatpush1.bf16.msra.mxu0 %v940
        %1014 = vmatprep.subr.bf16.mxu0 0
        %1015 = vmatpush1.bf16.msra.mxu0 %v941
        %1016 = vmatprep.subr.bf16.mxu0 0
        %1017 = vmatpush1.bf16.msra.mxu0 %v942
        %1018 = vmatprep.subr.bf16.mxu0 0
        %1019 = vmatpush1.bf16.msra.mxu0 %v943
        %1020 = vmatprep.subr.bf16.mxu0 0
        %1021 = vmatpush1.bf16.msra.mxu0 0
        %1022 = vmatprep.subr.bf16.mxu0 0
        %1023 = vmatpush1.bf16.msra.mxu0 0
        %1024 = vmatprep.subr.bf16.mxu0 0
        %1025 = vmatpush1.bf16.msra.mxu0 0
        %1026 = vmatprep.subr.bf16.mxu0 0
        %1027 = vmatpush1.bf16.msra.mxu0 0
        %1028 = vmatprep.subr.bf16.mxu0 0
        %1029 = vmatpush1.bf16.msra.mxu0 0
        %1030 = vmatprep.subr.bf16.mxu0 0
        %1031 = vmatpush1.bf16.msra.mxu0 0
        %1032 = vmatprep.subr.bf16.mxu0 0
        %1033 = vmatpush1.bf16.msra.mxu0 0
        %1034 = vmatprep.subr.bf16.mxu0 0
        %1035 = vmatpush1.bf16.msra.mxu0 0
        %1036 = vmatprep.subr.bf16.mxu0 0
        %1037 = vmatpush1.bf16.msra.mxu0 0
        %1038 = vmatprep.subr.bf16.mxu0 0
        %1039 = vmatpush1.bf16.msra.mxu0 0
        %1040 = vmatprep.subr.bf16.mxu0 0
        %1041 = vmatpush1.bf16.msra.mxu0 0
        %1042 = vmatprep.subr.bf16.mxu0 0
        %1043 = vmatpush1.bf16.msra.mxu0 0
        %1044 = vmatprep.mubr.bf16.mxu0 0
        %1045 = vmatmul.mubr.bf16.gmra.mrb[0].mxu0 %v1010
        %v1046 = vpop.f32.mrb[0].mxu0
        %v1047 = vadd.f32 %v1008, %v1046
        %v1048 = vpop.f32.mrb[0].mxu0
        %v1049 = vpop.f32.mrb[0].mxu0
        %v1050 = vpop.f32.mrb[0].mxu0
        %1051 = vdwg.mxu0
        %1052 = vmax.xlane.f32.xlu0 %v1047
        %v1053 = vpop.xlane.xlu0 %1052
        %v1054 = vsub.f32 %v1047, %v1053
        %v1055 = vmul.f32 %v1054, 1.442695
        %v1056 = vpow.pop %v1055
        %v1057 = vpack.c.bf16 %v1056, %v1056
        %1058 = vst [vmem:[#allocation5] sm:$0xf] %v1057
        %1059 = vmatprep.subr.bf16.mxu0 0
        %1060 = vmatpush1.bf16.msra.mxu0 %v1000
        %1061 = vmatprep.subr.bf16.mxu0 0
        %1062 = vmatpush1.bf16.msra.mxu0 %v1001
        %1063 = vmatprep.subr.bf16.mxu0 0
        %1064 = vmatpush1.bf16.msra.mxu0 %v1002
        %1065 = vmatprep.subr.bf16.mxu0 0
        %1066 = vmatpush1.bf16.msra.mxu0 %v1003
        %1067 = vmatprep.subr.bf16.mxu0 0
        %1068 = vmatpush1.bf16.msra.mxu0 %v1004
        %1069 = vmatprep.subr.bf16.mxu0 0
        %1070 = vmatpush1.bf16.msra.mxu0 %v1005
        %1071 = vmatprep.subr.bf16.mxu0 0
        %1072 = vmatpush1.bf16.msra.mxu0 %v1006
        %1073 = vmatprep.subr.bf16.mxu0 0
        %1074 = vmatpush1.bf16.msra.mxu0 %v1007
        %1075 = vmatprep.subr.bf16.mxu0 0
        %1076 = vmatpush1.bf16.msra.mxu0 0
        %1077 = vmatprep.subr.bf16.mxu0 0
        %1078 = vmatpush1.bf16.msra.mxu0 0
        %1079 = vmatprep.subr.bf16.mxu0 0
        %1080 = vmatpush1.bf16.msra.mxu0 0
        %1081 = vmatprep.subr.bf16.mxu0 0
        %1082 = vmatpush1.bf16.msra.mxu0 0
        %1083 = vmatprep.subr.bf16.mxu0 0
        %1084 = vmatpush1.bf16.msra.mxu0 0
        %1085 = vmatprep.subr.bf16.mxu0 0
        %1086 = vmatpush1.bf16.msra.mxu0 0
        %1087 = vmatprep.subr.bf16.mxu0 0
        %1088 = vmatpush1.bf16.msra.mxu0 0
        %1089 = vmatprep.subr.bf16.mxu0 0
        %1090 = vmatpush1.bf16.msra.mxu0 0
        %1091 = vmatprep.mubr.bf16.mxu0 0
        %1092 = vmatmul.mubr.bf16.gmra.mrb[0].mxu0 %v1057
        %v1093 = vpop.f32.mrb[0].mxu0
        %v1094 = vadd.f32 0.0, %v1093
        %v1095 = vpop.f32.mrb[0].mxu0
        %v1096 = vpop.f32.mrb[0].mxu0
        %v1097 = vpop.f32.mrb[0].mxu0
        %1098 = vdwg.mxu0
        %1099 = vst.msk [vmem:[#allocation6] sm:$0xff] %vm526, %v1094
        %v1100 = vld [vmem:[#allocation5] sm:$0xf]
        %v1101 = vld [vmem:[%s3] sm:$0xf]
        %v1102 = vld [vmem:[%s3 + $0x4] sm:$0xf]
        %v1103 = vld [vmem:[%s3 + $0x8] sm:$0xf]
        %v1104 = vld [vmem:[%s3 + $0xc] sm:$0xf]
        %v1105 = vld [vmem:[%s3 + $0x10] sm:$0xf]
        %v1106 = vld [vmem:[%s3 + $0x14] sm:$0xf]
        %v1107 = vld [vmem:[%s3 + $0x18] sm:$0xf]
        %v1108 = vld [vmem:[%s3 + $0x1c] sm:$0xf]
        %v1109 = vld [vmem:[%s3 + $0x20] sm:$0xf]
        %v1110 = vld [vmem:[%s3 + $0x24] sm:$0xf]
        %v1111 = vld [vmem:[%s3 + $0x28] sm:$0xf]
        %v1112 = vld [vmem:[%s3 + $0x2c] sm:$0xf]
        %v1113 = vld [vmem:[%s3 + $0x30] sm:$0xf]
        %v1114 = vld [vmem:[%s3 + $0x34] sm:$0xf]
        %v1115 = vld [vmem:[%s3 + $0x38] sm:$0xf]
        %v1116 = vld [vmem:[%s3 + $0x3c] sm:$0xf]
        %v1133 = vunpack.c.l.b16 %v1101
        %v1134 = vunpack.c.l.b16 %v1102
        %v1135 = vunpack.c.l.b16 %v1103
        %v1136 = vunpack.c.l.b16 %v1104
        %v1137 = vunpack.c.l.b16 %v1105
        %v1138 = vunpack.c.l.b16 %v1106
        %v1139 = vunpack.c.l.b16 %v1107
        %v1140 = vunpack.c.l.b16 %v1108
        %v1141 = vunpack.c.l.b16 %v1109
        %v1142 = vunpack.c.l.b16 %v1110
        %v1143 = vunpack.c.l.b16 %v1111
        %v1144 = vunpack.c.l.b16 %v1112
        %v1145 = vunpack.c.l.b16 %v1113
        %v1146 = vunpack.c.l.b16 %v1114
        %v1147 = vunpack.c.l.b16 %v1115
        %v1148 = vunpack.c.l.b16 %v1116
        %v1149 = vpack.c.b16 %v1134, %v1133
        %v1150 = vpack.c.b16 %v1136, %v1135
        %v1151 = vpack.c.b16 %v1138, %v1137
        %v1152 = vpack.c.b16 %v1140, %v1139
        %v1153 = vpack.c.b16 %v1142, %v1141
        %v1154 = vpack.c.b16 %v1144, %v1143
        %v1155 = vpack.c.b16 %v1146, %v1145
        %v1156 = vpack.c.b16 %v1148, %v1147
        %1165 = vmatprep.subr.bf16.mxu0 0
        %1166 = vmatpush1.bf16.msra.mxu0 %v1149
        %1167 = vmatprep.subr.bf16.mxu0 0
        %1168 = vmatpush1.bf16.msra.mxu0 %v1150
        %1169 = vmatprep.subr.bf16.mxu0 0
        %1170 = vmatpush1.bf16.msra.mxu0 %v1151
        %1171 = vmatprep.subr.bf16.mxu0 0
        %1172 = vmatpush1.bf16.msra.mxu0 %v1152
        %1173 = vmatprep.subr.bf16.mxu0 0
        %1174 = vmatpush1.bf16.msra.mxu0 %v1153
        %1175 = vmatprep.subr.bf16.mxu0 0
        %1176 = vmatpush1.bf16.msra.mxu0 %v1154
        %1177 = vmatprep.subr.bf16.mxu0 0
        %1178 = vmatpush1.bf16.msra.mxu0 %v1155
        %1179 = vmatprep.subr.bf16.mxu0 0
        %1180 = vmatpush1.bf16.msra.mxu0 %v1156
        %1181 = vmatprep.subr.bf16.mxu0 0
        %1182 = vmatpush1.bf16.msra.mxu0 0
        %1183 = vmatprep.subr.bf16.mxu0 0
        %1184 = vmatpush1.bf16.msra.mxu0 0
        %1185 = vmatprep.subr.bf16.mxu0 0
        %1186 = vmatpush1.bf16.msra.mxu0 0
        %1187 = vmatprep.subr.bf16.mxu0 0
        %1188 = vmatpush1.bf16.msra.mxu0 0
        %1189 = vmatprep.subr.bf16.mxu0 0
        %1190 = vmatpush1.bf16.msra.mxu0 0
        %1191 = vmatprep.subr.bf16.mxu0 0
        %1192 = vmatpush1.bf16.msra.mxu0 0
        %1193 = vmatprep.subr.bf16.mxu0 0
        %1194 = vmatpush1.bf16.msra.mxu0 0
        %1195 = vmatprep.subr.bf16.mxu0 0
        %1196 = vmatpush1.bf16.msra.mxu0 0
        %1197 = vmatprep.mubr.bf16.mxu0 0
        %1198 = vmatmul.mubr.bf16.gmra.mrb[0].mxu0 %v1100
        %v1199 = vpop.f32.mrb[0].mxu0
        %v1200 = vadd.f32 0.0, %v1199
        %v1201 = vpop.f32.mrb[0].mxu0
        %v1202 = vpop.f32.mrb[0].mxu0
        %v1203 = vpop.f32.mrb[0].mxu0
        %1204 = vdwg.mxu0
        %v1205 = vmax.f32 %v1200, 1e-30
        %v1206 = vld [vmem:[#allocation6] sm:$0xff]
        %v1207 = vrcp.pop %v1205
        %v1208 = vmul.f32 %v1206, %v1207
        %v1209 = vpack.c.bf16 %v1208, %v1208
        %v1210 = vld [vmem:[#allocation10] sm:$0xf]
        %v1211 = vld [vmem:[#allocation10 + $0x4] sm:$0xf]
        %v1212 = vld [vmem:[#allocation10 + $0x8] sm:$0xf]
        %v1213 = vld [vmem:[#allocation10 + $0xc] sm:$0xf]
        %v1214 = vld [vmem:[#allocation10 + $0x10] sm:$0xf]
        %v1215 = vld [vmem:[#allocation10 + $0x14] sm:$0xf]
        %v1216 = vld [vmem:[#allocation10 + $0x18] sm:$0xf]
        %v1217 = vld [vmem:[#allocation10 + $0x1c] sm:$0xf]
        %v1218 = vld [vmem:[%s7] sm:$0x1]
        %v1220 = vlaneseq
        %v1221 = vshrl.u32 %v1220, 7
        %v1222 = vsub.s32 0, %v1221
        %v1223 = vrot.slane %v1218, %v1222
        %v1233 = vunpack.c.l.b16 %v1210
        %v1234 = vunpack.c.l.b16 %v1211
        %v1235 = vunpack.c.l.b16 %v1212
        %v1236 = vunpack.c.l.b16 %v1213
        %v1237 = vunpack.c.l.b16 %v1214
        %v1238 = vunpack.c.l.b16 %v1215
        %v1239 = vunpack.c.l.b16 %v1216
        %v1240 = vunpack.c.l.b16 %v1217
        %v1241 = vpack.c.b16 %v1234, %v1233
        %v1242 = vpack.c.b16 %v1236, %v1235
        %v1243 = vpack.c.b16 %v1238, %v1237
        %v1244 = vpack.c.b16 %v1240, %v1239
        %v1250 = vsel %vm526, %v1209, 0
        %1252 = vmatprep.subr.bf16.mxu0 0
        %1253 = vmatpush1.bf16.msra.mxu0 %v1241
        %1254 = vmatprep.subr.bf16.mxu0 0
        %1255 = vmatpush1.bf16.msra.mxu0 %v1242
        %1256 = vmatprep.subr.bf16.mxu0 0
        %1257 = vmatpush1.bf16.msra.mxu0 %v1243
        %1258 = vmatprep.subr.bf16.mxu0 0
        %1259 = vmatpush1.bf16.msra.mxu0 %v1244
        %1260 = vmatprep.subr.bf16.mxu0 0
        %1261 = vmatpush1.bf16.msra.mxu0 0
        %1262 = vmatprep.subr.bf16.mxu0 0
        %1263 = vmatpush1.bf16.msra.mxu0 0
        %1264 = vmatprep.subr.bf16.mxu0 0
        %1265 = vmatpush1.bf16.msra.mxu0 0
        %1266 = vmatprep.subr.bf16.mxu0 0
        %1267 = vmatpush1.bf16.msra.mxu0 0
        %1268 = vmatprep.subr.bf16.mxu0 0
        %1269 = vmatpush1.bf16.msra.mxu0 0
        %1270 = vmatprep.subr.bf16.mxu0 0
        %1271 = vmatpush1.bf16.msra.mxu0 0
        %1272 = vmatprep.subr.bf16.mxu0 0
        %1273 = vmatpush1.bf16.msra.mxu0 0
        %1274 = vmatprep.subr.bf16.mxu0 0
        %1275 = vmatpush1.bf16.msra.mxu0 0
        %1276 = vmatprep.subr.bf16.mxu0 0
        %1277 = vmatpush1.bf16.msra.mxu0 0
        %1278 = vmatprep.subr.bf16.mxu0 0
        %1279 = vmatpush1.bf16.msra.mxu0 0
        %1280 = vmatprep.subr.bf16.mxu0 0
        %1281 = vmatpush1.bf16.msra.mxu0 0
        %1282 = vmatprep.subr.bf16.mxu0 0
        %1283 = vmatpush1.bf16.msra.mxu0 0
        %1284 = vmatprep.mubr.bf16.mxu0 0
        %1285 = vmatmul.mubr.bf16.gmra.mrb[0].mxu0 %v1250
        %v1286 = vpop.f32.mrb[0].mxu0
        %v1287 = vadd.f32 %v1223, %v1286
        %v1288 = vpop.f32.mrb[0].mxu0
        %v1289 = vpop.f32.mrb[0].mxu0
        %v1290 = vpop.f32.mrb[0].mxu0
        %1291 = vdwg.mxu0
        %v1292 = vld [vmem:[%s458] sm:$0xff]
        %v1293 = vadd.f32 %v1287, %v1292
        %v1294 = vsel %vm526, %v1293, 0.0
        %1295 = vadd.xlane.f32.xlu0 %v1294
        %v1296 = vpop.xlane.xlu0 %1295
        %v1297 = vrcp.pop 64.0
        %v1298 = vmul.f32 %v1296, %v1297
        %v1299 = vsub.f32 %v1293, %v1298
        %v1300 = vmul.f32 %v1299, %v1299
        %v1301 = vsel %vm526, %v1300, 0.0
        %1302 = vadd.xlane.f32.xlu0 %v1301
        %v1303 = vpop.xlane.xlu0 %1302
        %v1304 = vmul.f32 %v1303, %v1297
        %v1305 = vadd.f32 %v1304, 1e-05
        %v1306 = vrsqrt.pop %v1305
        %v1307 = vmul.f32 %v1299, %v1306
        %v1308 = vld [vmem:[%s8] sm:$0x1]
        %v1310 = vlaneseq
        %v1311 = vshrl.u32 %v1310, 7
        %v1312 = vsub.s32 0, %v1311
        %v1313 = vrot.slane %v1308, %v1312
        %v1315 = vmul.f32 %v1307, %v1313
        %v1316 = vld [vmem:[%s9] sm:$0x1]
        %v1318 = vlaneseq
        %v1319 = vshrl.u32 %v1318, 7
        %v1320 = vsub.s32 0, %v1319
        %v1321 = vrot.slane %v1316, %v1320
        %v1323 = vadd.f32 %v1315, %v1321
        %v1324 = vsel %vm526, %v1323, -inf
        %v1325 = vrot.slane %v1324, 4
        %v1326 = vmax.f32 %v1324, %v1325
        %v1327 = vrot.slane %v1326, 2
        %v1328 = vmax.f32 %v1326, %v1327
        %v1329 = vrot.slane %v1328, 1
        %v1330 = vmax.f32 %v1328, %v1329
        %v1331 = vsel %vm526, %v1323, 0.0
        %v1332 = vrot.slane %v1331, 4
        %v1333 = vadd.f32 %v1331, %v1332
        %v1334 = vrot.slane %v1333, 2
        %v1335 = vadd.f32 %v1333, %v1334
        %v1336 = vrot.slane %v1335, 1
        %v1337 = vadd.f32 %v1335, %v1336
        %v1338 = vrcp.pop 8.0
        %v1339 = vmul.f32 %v1337, %v1338
        %v1340 = vld [vmem:[%s10] sm:$0x1]
        %v1341 = vmul.f32 %v1330, %v1340
        %vm1342 = vcmask 516096
        %v1343 = vsel %vm1342, %v1341, 0.0
        %1344 = vadd.xlane.f32.xlu0 %v1343
        %v1345 = vpop.xlane.xlu0 %1344
        %v1346 = vld [vmem:[%s10 + $0x1] sm:$0x1]
        %v1347 = vmul.f32 %v1339, %v1346
        %v1348 = vsel %vm1342, %v1347, 0.0
        %1349 = vadd.xlane.f32.xlu0 %v1348
        %v1350 = vpop.xlane.xlu0 %1349
        %v1351 = vadd.f32 %v1345, %v1350
        %v1352 = vld [vmem:[#allocation7] sm:$0x1]
        %v1353 = vadd.f32 %v1351, %v1352
        %v1354 = vlaneseq
        %v1355 = vshrl.u32 %v1354, 7
        %v1356 = vsub.s32 0, %v1355
        %v1357 = vrot.slane %v1353, %v1356
        %vm1358 = vcmask 7168
        %1359 = vst.msk [vmem:[%s462] sm:$0xff] %vm1358, %v1357
        %p1360 = scmp.lt.s32.totalorder %s29, 1
        %s1361 = scalar_select %p1360, %s29, 1
        %s1362 = smul.addr %s1361, 8
        %s1363 = scalar_lea.vmem %s12, %s1362
        // Predicated region
        $region77: #{tpu_custom_call.1} parent=67 // pred_check
          %p1364 = pneg %p309
        $region78: #{tpu_custom_call.1} parent=67 // pred_check_branch
          %1366 = sbr.rel (%p1364) target = $region80
        $region79: #{tpu_custom_call.1} parent=67 // pred_region
          _
        $region80: #{tpu_custom_call.1} parent=67 // pred_fallthru
          _
      $region68: #{tpu_custom_call.1} parent=5 // pred_fallthru
        _
      %p1367 = scmp.le.s32.totalorder 2, %s24
      // Predicated region
      $region81: #{tpu_custom_call.1} parent=5 // pred_check
        %p1368 = pneg %p1367
      $region82: #{tpu_custom_call.1} parent=5 // pred_check_branch
        %1370 = sbr.rel (%p1368) target = $region84
      $region83: #{tpu_custom_call.1} parent=5 // pred_region
        %s1371 = ssub.s32 %s24, 2
        // Predicated region
        $region85: #{tpu_custom_call.1} parent=83 // pred_check
          %p1372 = pneg %p315
        $region86: #{tpu_custom_call.1} parent=83 // pred_check_branch
          %1374 = sbr.rel (%p1372) target = $region88
        $region87: #{tpu_custom_call.1} parent=83 // pred_region
          %p1375 = scmp.lt.s32.totalorder %s30, 1
          %s1376 = scalar_select %p1375, %s30, 1
          %s1377 = smul.addr %s1376, 8
          %s1378 = scalar_lea.vmem %s12, %s1377
        $region88: #{tpu_custom_call.1} parent=83 // pred_fallthru
          _
      $region84: #{tpu_custom_call.1} parent=5 // pred_fallthru
        _
    $region6: #{tpu_custom_call.1} parent=1 // loop_footer
      %s28 = sadd.s32 1, %s24
    $region7: #{tpu_custom_call.1} parent=1 // loop_footer_branch
      %23 = sbr.rel target = $region3
    $region8: #{tpu_custom_call.1} parent=1 // loop_exit
      _
    %1379 = vsyncpa [#allocation9], 1
    %s1380 = scalar_lea.sflag [#allocation9], 1
    %1381 = vsyncpa %s1380, 1
    %1382 = vsyncpa [#allocation11], 1

</llo_original>
